<compile_context>
chip_gen: v7x
topology: tpu7x:2x2x1
jax: 0.10.0
libtpu: 0.0.40
codegen_flags: <defaults>
</compile_context>

<pallas_src>
import functools

import jax
import jax.numpy as jnp
from jax.experimental import pallas as pl
from jax.experimental.pallas import tpu as pltpu


def _dwconv_kernel(x_ref, w_ref, b_ref, o_ref, xp_ref, *, H, W):
    """One (channel-tile, batch) block of depthwise 3x3 conv, padding=1, stride=1.

    x_ref : (1, H, W, Ct)        input tile (NHWC)
    w_ref : (3, 3, Ct)           depthwise taps
    b_ref : (1, Ct)              bias
    o_ref : (1, H, W, Ct)        output tile
    xp_ref: (H+2, W, Ct) x-dtype VMEM scratch, zero-padded along H only
    """
    Ct = o_ref.shape[-1]

    # --- Build the H halo in VMEM; the W halo is handled by rolls + masks below. ---
    # Rows 0 and H+1 are cheap (1, W, Ct) zero stores; the interior is written once
    # straight from the input block (all nine taps are then read back from scratch,
    # so no separate live copy of x is kept around).
    zrow = jnp.zeros((1, W, Ct), xp_ref.dtype)
    xp_ref[0:1] = zrow
    xp_ref[H + 1:H + 2] = zrow
    xp_ref[1:H + 1] = x_ref[0]

    w = w_ref[...].astype(jnp.float32)          # (3, 3, Ct), read once
    b = b_ref[...].astype(jnp.float32)          # (1, Ct)

    # Aligned leading-axis slab reads: rows (h-1, h, h+1) for every output row h.
    r0 = xp_ref[0:H].astype(jnp.float32)        # (H, W, Ct)
    r1 = xp_ref[1:H + 1].astype(jnp.float32)
    r2 = xp_ref[2:H + 2].astype(jnp.float32)

    # Per-output-column partial sums: exactly one vmul + one vadd per tap, no
    # unaligned reads.  (Ct,)-shaped weights broadcast per-lane against the slabs.
    acc_c = r0 * w[0, 1] + r1 * w[1, 1] + r2 * w[2, 1]      # taps at column w   (j == 1)
    acc_l = r0 * w[0, 0] + r1 * w[1, 0] + r2 * w[2, 0]      # taps at column w-1 (j == 0)
    acc_r = r0 * w[0, 2] + r1 * w[1, 2] + r2 * w[2, 2]      # taps at column w+1 (j == 2)

    # +-1 shifts along W via XLU rotates.  pltpu.roll matches jnp.roll semantics:
    # out[w] = in[(w - shift) % W], so shift=+1 fetches the left neighbour and
    # shift=W-1 (== -1 mod W) fetches the right neighbour.  The wrapped boundary
    # column of each rolled sum is zeroed by the mask (the conv's zero padding).
    col = jax.lax.broadcasted_iota(jnp.int32, (W, Ct), 0)
    left = jnp.where(col > 0, pltpu.roll(acc_l, shift=1, axis=1), 0.0)
    right = jnp.where(col < W - 1, pltpu.roll(acc_r, shift=W - 1, axis=1), 0.0)

    o_ref[0] = (acc_c + left + right + b).astype(o_ref.dtype)


def _pick_channel_tile(C, B, H, W, itemsize):
    """Largest multiple-of-128 divisor of C whose per-step VMEM footprint fits a
    conservative budget (v7x only has 64 MiB physical VMEM), preferring a tile that
    leaves >= 2 total grid steps so both v7x TensorCores get work."""
    divisors = [d for d in range(128, C + 1, 128) if C % d == 0]
    if not divisors:
        # TODO(synk): C not a multiple of 128 -> single lane-masked channel block
        # (correct, but partial stores are slower).
        return C

    budget = 16 << 20  # ~16 MiB per step keeps double-buffered pipelining on v7x

    def footprint(ct):
        io = 4 * H * W * ct * itemsize          # double-buffered in + out blocks
        halo = (H + 2) * W * ct * itemsize      # scratch (input dtype)
        temps = 4 * H * W * ct * 4              # f32 accumulators / rolled copies
        return io + halo + temps

    fits = sorted(d for d in divisors if footprint(d) <= budget) or [divisors[0]]
    ct = fits[-1]
    if B * (C // ct) < 2 and len(fits) > 1:
        ct = fits[-2]  # shrink the tile so the grid has >= 2 parallel steps (v7x megacore)
    return ct


def dwconv_forward(x, weight, bias, H, W):
    """DWConv.forward.  x: (B, N=H*W, C); weight: (C, 1, 3, 3) torch layout; bias: (C,)."""
    B, N, C = x.shape
    assert N == H * W, (N, H, W)
    assert weight.shape == (C, 1, 3, 3) and bias.shape == (C,)

    # (B, N, C) row-major over (H, W) is already NHWC — pure reshape, no data movement.
    # HBM I/O stays in the model's native dtype (never upcast in the wrapper).
    x_img = x.reshape(B, H, W, C)
    # torch depthwise weight (C, 1, 3, 3) -> (3, 3, C): w_hwc[i, j, c] = weight[c, 0, i, j]
    w_hwc = jnp.transpose(weight.reshape(C, 3, 3), (1, 2, 0))

    Ct = _pick_channel_tile(C, B, H, W, jnp.dtype(x.dtype).itemsize)
    # Batch innermost: consecutive grid steps keep the same weight/bias block index,
    # so their (3,3,Ct)/(1,Ct) DMAs are elided by the pipeline.
    grid = (C // Ct, B)

    out = pl.pallas_call(
        functools.partial(_dwconv_kernel, H=H, W=W),
        out_shape=jax.ShapeDtypeStruct((B, H, W, C), x.dtype),
        grid=grid,
        in_specs=[
            pl.BlockSpec((1, H, W, Ct), lambda c, b: (b, 0, 0, c)),
            pl.BlockSpec((3, 3, Ct), lambda c, b: (0, 0, c)),
            pl.BlockSpec((1, Ct), lambda c, b: (0, c)),
        ],
        out_specs=pl.BlockSpec((1, H, W, Ct), lambda c, b: (b, 0, 0, c)),
        scratch_shapes=[pltpu.VMEM((H + 2, W, Ct), x.dtype)],
        compiler_params=pltpu.CompilerParams(
            dimension_semantics=("parallel", "parallel"),
        ),
    )(x_img, w_hwc, bias.reshape(1, C))
    return out.reshape(B, N, C)


def dwconv_ref(x, weight, bias, H, W):
    """Plain-JAX reference (same math, same layout) for correctness checking."""
    B, N, C = x.shape
    img = x.reshape(B, H, W, C).astype(jnp.float32)
    pad = jnp.pad(img, ((0, 0), (1, 1), (1, 1), (0, 0)))
    w = jnp.transpose(weight.reshape(C, 3, 3), (1, 2, 0)).astype(jnp.float32)
    out = jnp.zeros((B, H, W, C), jnp.float32)
    for i in range(3):
        for j in range(3):
            out = out + pad[:, i:i + H, j:j + W, :] * w[i, j]
    out = out + bias.astype(jnp.float32)
    return out.reshape(B, N, C).astype(x.dtype)


def init_dwconv_params(key, dim):
    """Deterministic synthetic weights in the torch Conv2d(dim, dim, 3, groups=dim) layout."""
    kw, kb = jax.random.split(key)
    bound = 1.0 / (9.0 ** 0.5)          # fan_in = 1 * 3 * 3 (per-group)
    weight = jax.random.uniform(kw, (dim, 1, 3, 3), jnp.float32, minval=-bound, maxval=bound)
    bias = jax.random.uniform(kb, (dim,), jnp.float32, minval=-bound, maxval=bound)
    return weight, bias


if __name__ == "__main__":
    key = jax.random.PRNGKey(0)
    kx, kp = jax.random.split(key)

    B, H, W, C = 2, 16, 16, 256          # DWConv(dim=256) on a 16x16 token grid
    N = H * W
    x = jax.random.normal(kx, (B, N, C), jnp.float32)
    weight, bias = init_dwconv_params(kp, C)

    fwd = jax.jit(functools.partial(dwconv_forward, H=H, W=W))
    out = fwd(x, weight, bias)
    jax.block_until_ready(out)

    ref = dwconv_ref(x, weight, bias, H, W)
    assert out.shape == (B, N, C), out.shape
    assert bool(jnp.all(jnp.isfinite(out)))
    max_err = float(jnp.max(jnp.abs(out - ref)))
    assert max_err < 1e-4, max_err
    print("KERNEL_OK")
</pallas_src>

<mosaic_0001>
module attributes {stable_mosaic.version = 11 : i64} {
  func.func @_dwconv_kernel(%arg0: i32, %arg1: i32, %arg2: memref<1x16x16x256xf32, #tpu.memory_space<vmem>>, %arg3: memref<3x3x256xf32, #tpu.memory_space<vmem>>, %arg4: memref<1x256xf32, #tpu.memory_space<vmem>>, %arg5: memref<1x16x16x256xf32, #tpu.memory_space<vmem>>, %arg6: memref<18x16x256xf32, #tpu.memory_space<vmem>>) attributes {dimension_semantics = [#tpu.dimension_semantics<parallel>, #tpu.dimension_semantics<parallel>], iteration_bounds = array<i64: 1, 2>, scalar_prefetch = 0 : i64, scratch_operands = 1 : i64, tpu.core_type = #tpu.core_type<tc>, window_params = [{transform_indices = @transform_0, window_bounds = array<i64: 1, 16, 16, 256>}, {transform_indices = @transform_1, window_bounds = array<i64: 3, 3, 256>}, {transform_indices = @transform_2, window_bounds = array<i64: 1, 256>}, {transform_indices = @transform_3, window_bounds = array<i64: 1, 16, 16, 256>}]} {
    %cst = arith.constant 0.000000e+00 : f32
    %0 = vector.broadcast %cst : f32 to vector<1x16x256xf32>
    %c0 = arith.constant 0 : index
    %c0_0 = arith.constant 0 : index
    %c0_1 = arith.constant 0 : index
    %1 = vector.load %arg6[%c0, %c0_0, %c0_1] : memref<18x16x256xf32, #tpu.memory_space<vmem>>, vector<1x16x256xf32>
    tpu.vector_store %arg6[%c0, %c0_0, %c0_1], %0 {strides = array<i32>} : memref<18x16x256xf32, #tpu.memory_space<vmem>>, vector<1x16x256xf32>,
    %c17 = arith.constant 17 : index
    %c0_2 = arith.constant 0 : index
    %c0_3 = arith.constant 0 : index
    %2 = vector.load %arg6[%c17, %c0_2, %c0_3] : memref<18x16x256xf32, #tpu.memory_space<vmem>>, vector<1x16x256xf32>
    tpu.vector_store %arg6[%c17, %c0_2, %c0_3], %0 {strides = array<i32>} : memref<18x16x256xf32, #tpu.memory_space<vmem>>, vector<1x16x256xf32>,
    %c0_4 = arith.constant 0 : index
    %c0_5 = arith.constant 0 : index
    %c0_6 = arith.constant 0 : index
    %c0_7 = arith.constant 0 : index
    %3 = vector.load %arg2[%c0_4, %c0_5, %c0_6, %c0_7] : memref<1x16x16x256xf32, #tpu.memory_space<vmem>>, vector<1x16x16x256xf32>
    %4 = vector.shape_cast %3 : vector<1x16x16x256xf32> to vector<16x16x256xf32>
    %c1 = arith.constant 1 : index
    %c0_8 = arith.constant 0 : index
    %c0_9 = arith.constant 0 : index
    %5 = vector.load %arg6[%c1, %c0_8, %c0_9] : memref<18x16x256xf32, #tpu.memory_space<vmem>>, vector<16x16x256xf32>
    tpu.vector_store %arg6[%c1, %c0_8, %c0_9], %4 {strides = array<i32>} : memref<18x16x256xf32, #tpu.memory_space<vmem>>, vector<16x16x256xf32>,
    %c0_10 = arith.constant 0 : index
    %c0_11 = arith.constant 0 : index
    %c0_12 = arith.constant 0 : index
    %6 = vector.load %arg3[%c0_10, %c0_11, %c0_12] : memref<3x3x256xf32, #tpu.memory_space<vmem>>, vector<3x3x256xf32>
    %c0_13 = arith.constant 0 : index
    %c0_14 = arith.constant 0 : index
    %7 = vector.load %arg4[%c0_13, %c0_14] : memref<1x256xf32, #tpu.memory_space<vmem>>, vector<1x256xf32>
    %c0_15 = arith.constant 0 : index
    %c0_16 = arith.constant 0 : index
    %c0_17 = arith.constant 0 : index
    %8 = vector.load %arg6[%c0_15, %c0_16, %c0_17] : memref<18x16x256xf32, #tpu.memory_space<vmem>>, vector<16x16x256xf32>
    %c1_18 = arith.constant 1 : index
    %c0_19 = arith.constant 0 : index
    %c0_20 = arith.constant 0 : index
    %9 = vector.load %arg6[%c1_18, %c0_19, %c0_20] : memref<18x16x256xf32, #tpu.memory_space<vmem>>, vector<16x16x256xf32>
    %c2 = arith.constant 2 : index
    %c0_21 = arith.constant 0 : index
    %c0_22 = arith.constant 0 : index
    %10 = vector.load %arg6[%c2, %c0_21, %c0_22] : memref<18x16x256xf32, #tpu.memory_space<vmem>>, vector<16x16x256xf32>
    %11 = vector.extract_strided_slice %6 {offsets = [0, 1, 0], sizes = [1, 1, 256], strides = [1, 1, 1]} : vector<3x3x256xf32> to vector<1x1x256xf32>
    %12 = vector.shape_cast %11 : vector<1x1x256xf32> to vector<256xf32>
    %13 = vector.shape_cast %12 : vector<256xf32> to vector<1x1x256xf32>
    %14 = vector.broadcast %13 : vector<1x1x256xf32> to vector<16x16x256xf32>
    %15 = arith.mulf %8, %14 : vector<16x16x256xf32>
    %16 = vector.extract_strided_slice %6 {offsets = [1, 1, 0], sizes = [1, 1, 256], strides = [1, 1, 1]} : vector<3x3x256xf32> to vector<1x1x256xf32>
    %17 = vector.shape_cast %16 : vector<1x1x256xf32> to vector<256xf32>
    %18 = vector.shape_cast %17 : vector<256xf32> to vector<1x1x256xf32>
    %19 = vector.broadcast %18 : vector<1x1x256xf32> to vector<16x16x256xf32>
    %20 = arith.mulf %9, %19 : vector<16x16x256xf32>
    %21 = arith.addf %15, %20 : vector<16x16x256xf32>
    %22 = vector.extract_strided_slice %6 {offsets = [2, 1, 0], sizes = [1, 1, 256], strides = [1, 1, 1]} : vector<3x3x256xf32> to vector<1x1x256xf32>
    %23 = vector.shape_cast %22 : vector<1x1x256xf32> to vector<256xf32>
    %24 = vector.shape_cast %23 : vector<256xf32> to vector<1x1x256xf32>
    %25 = vector.broadcast %24 : vector<1x1x256xf32> to vector<16x16x256xf32>
    %26 = arith.mulf %10, %25 : vector<16x16x256xf32>
    %27 = arith.addf %21, %26 : vector<16x16x256xf32>
    %28 = vector.extract_strided_slice %6 {offsets = [0, 0, 0], sizes = [1, 1, 256], strides = [1, 1, 1]} : vector<3x3x256xf32> to vector<1x1x256xf32>
    %29 = vector.shape_cast %28 : vector<1x1x256xf32> to vector<256xf32>
    %30 = vector.shape_cast %29 : vector<256xf32> to vector<1x1x256xf32>
    %31 = vector.broadcast %30 : vector<1x1x256xf32> to vector<16x16x256xf32>
    %32 = arith.mulf %8, %31 : vector<16x16x256xf32>
    %33 = vector.extract_strided_slice %6 {offsets = [1, 0, 0], sizes = [1, 1, 256], strides = [1, 1, 1]} : vector<3x3x256xf32> to vector<1x1x256xf32>
    %34 = vector.shape_cast %33 : vector<1x1x256xf32> to vector<256xf32>
    %35 = vector.shape_cast %34 : vector<256xf32> to vector<1x1x256xf32>
    %36 = vector.broadcast %35 : vector<1x1x256xf32> to vector<16x16x256xf32>
    %37 = arith.mulf %9, %36 : vector<16x16x256xf32>
    %38 = arith.addf %32, %37 : vector<16x16x256xf32>
    %39 = vector.extract_strided_slice %6 {offsets = [2, 0, 0], sizes = [1, 1, 256], strides = [1, 1, 1]} : vector<3x3x256xf32> to vector<1x1x256xf32>
    %40 = vector.shape_cast %39 : vector<1x1x256xf32> to vector<256xf32>
    %41 = vector.shape_cast %40 : vector<256xf32> to vector<1x1x256xf32>
    %42 = vector.broadcast %41 : vector<1x1x256xf32> to vector<16x16x256xf32>
    %43 = arith.mulf %10, %42 : vector<16x16x256xf32>
    %44 = arith.addf %38, %43 : vector<16x16x256xf32>
    %45 = vector.extract_strided_slice %6 {offsets = [0, 2, 0], sizes = [1, 1, 256], strides = [1, 1, 1]} : vector<3x3x256xf32> to vector<1x1x256xf32>
    %46 = vector.shape_cast %45 : vector<1x1x256xf32> to vector<256xf32>
    %47 = vector.shape_cast %46 : vector<256xf32> to vector<1x1x256xf32>
    %48 = vector.broadcast %47 : vector<1x1x256xf32> to vector<16x16x256xf32>
    %49 = arith.mulf %8, %48 : vector<16x16x256xf32>
    %50 = vector.extract_strided_slice %6 {offsets = [1, 2, 0], sizes = [1, 1, 256], strides = [1, 1, 1]} : vector<3x3x256xf32> to vector<1x1x256xf32>
    %51 = vector.shape_cast %50 : vector<1x1x256xf32> to vector<256xf32>
    %52 = vector.shape_cast %51 : vector<256xf32> to vector<1x1x256xf32>
    %53 = vector.broadcast %52 : vector<1x1x256xf32> to vector<16x16x256xf32>
    %54 = arith.mulf %9, %53 : vector<16x16x256xf32>
    %55 = arith.addf %49, %54 : vector<16x16x256xf32>
    %56 = vector.extract_strided_slice %6 {offsets = [2, 2, 0], sizes = [1, 1, 256], strides = [1, 1, 1]} : vector<3x3x256xf32> to vector<1x1x256xf32>
    %57 = vector.shape_cast %56 : vector<1x1x256xf32> to vector<256xf32>
    %58 = vector.shape_cast %57 : vector<256xf32> to vector<1x1x256xf32>
    %59 = vector.broadcast %58 : vector<1x1x256xf32> to vector<16x16x256xf32>
    %60 = arith.mulf %10, %59 : vector<16x16x256xf32>
    %61 = arith.addf %55, %60 : vector<16x16x256xf32>
    %62 = tpu.iota {dimensions = array<i32: 0>} : vector<16x256xi32>
    %c0_i32 = arith.constant 0 : i32
    %63 = vector.broadcast %c0_i32 : i32 to vector<16x256xi32>
    %64 = arith.cmpi sgt, %62, %63 : vector<16x256xi32>
    %c1_i32 = arith.constant 1 : i32
    %65 = tpu.dynamic_rotate %44 by %c1_i32 dim 1 : vector<16x16x256xf32>, i32 -> vector<16x16x256xf32>
    %cst_23 = arith.constant 0.000000e+00 : f32
    %66 = vector.shape_cast %64 : vector<16x256xi1> to vector<1x16x256xi1>
    %67 = vector.broadcast %66 : vector<1x16x256xi1> to vector<16x16x256xi1>
    %68 = vector.broadcast %cst_23 : f32 to vector<16x16x256xf32>
    %69 = arith.select %67, %65, %68 : vector<16x16x256xi1>, vector<16x16x256xf32>
    %c15_i32 = arith.constant 15 : i32
    %70 = vector.broadcast %c15_i32 : i32 to vector<16x256xi32>
    %71 = arith.cmpi slt, %62, %70 : vector<16x256xi32>
    %c15_i32_24 = arith.constant 15 : i32
    %72 = tpu.dynamic_rotate %61 by %c15_i32_24 dim 1 : vector<16x16x256xf32>, i32 -> vector<16x16x256xf32>
    %cst_25 = arith.constant 0.000000e+00 : f32
    %73 = vector.shape_cast %71 : vector<16x256xi1> to vector<1x16x256xi1>
    %74 = vector.broadcast %73 : vector<1x16x256xi1> to vector<16x16x256xi1>
    %75 = vector.broadcast %cst_25 : f32 to vector<16x16x256xf32>
    %76 = arith.select %74, %72, %75 : vector<16x16x256xi1>, vector<16x16x256xf32>
    %77 = arith.addf %27, %69 : vector<16x16x256xf32>
    %78 = arith.addf %77, %76 : vector<16x16x256xf32>
    %79 = vector.shape_cast %7 : vector<1x256xf32> to vector<1x1x256xf32>
    %80 = vector.broadcast %79 : vector<1x1x256xf32> to vector<16x16x256xf32>
    %81 = arith.addf %78, %80 : vector<16x16x256xf32>
    %c0_26 = arith.constant 0 : index
    %c0_27 = arith.constant 0 : index
    %c0_28 = arith.constant 0 : index
    %c0_29 = arith.constant 0 : index
    %82 = vector.load %arg5[%c0_26, %c0_27, %c0_28, %c0_29] : memref<1x16x16x256xf32, #tpu.memory_space<vmem>>, vector<1x16x16x256xf32>
    %83 = vector.shape_cast %82 : vector<1x16x16x256xf32> to vector<16x16x256xf32>
    %84 = vector.shape_cast %81 : vector<16x16x256xf32> to vector<1x16x16x256xf32>
    tpu.vector_store %arg5[%c0_26, %c0_27, %c0_28, %c0_29], %84 {strides = array<i32>} : memref<1x16x16x256xf32, #tpu.memory_space<vmem>>, vector<1x16x16x256xf32>,
    return
  }
  func.func @transform_0(%arg0: i32, %arg1: i32) -> (i32, i32, i32, i32) {
    %c0_i32 = arith.constant 0 : i32
    %c0_i32_0 = arith.constant 0 : i32
    %c0_i32_1 = arith.constant 0 : i32
    return %arg1, %c0_i32, %c0_i32_0, %arg0 : i32, i32, i32, i32
  }
  func.func @transform_1(%arg0: i32, %arg1: i32) -> (i32, i32, i32) {
    %c0_i32 = arith.constant 0 : i32
    %c0_i32_0 = arith.constant 0 : i32
    %c0_i32_1 = arith.constant 0 : i32
    return %c0_i32, %c0_i32_0, %arg0 : i32, i32, i32
  }
  func.func @transform_2(%arg0: i32, %arg1: i32) -> (i32, i32) {
    %c0_i32 = arith.constant 0 : i32
    %c0_i32_0 = arith.constant 0 : i32
    return %c0_i32, %arg0 : i32, i32
  }
  func.func @transform_3(%arg0: i32, %arg1: i32) -> (i32, i32, i32, i32) {
    %c0_i32 = arith.constant 0 : i32
    %c0_i32_0 = arith.constant 0 : i32
    %c0_i32_1 = arith.constant 0 : i32
    return %arg1, %c0_i32, %c0_i32_0, %arg0 : i32, i32, i32, i32
  }
}

</mosaic_0001>

<llo_original>
// kernel: dwconv_forward.1
$region0: #{dwconv_forward.1}
  #allocation0 [shape = 'u32[]', space=smem, size = 0x4, offset = 0x4, fixed_abs, tag = 'smem constant byte address 0x4 - core index']
  #allocation1 [shape = 'u32[144,128]{1,0:T(1,128)}', space=vmem, size = 0x12000, scoped, tag = 'internal scratch']
  #allocation2 [shape = 'f32[18,16,256]{2,1,0:T(8,128)}', space=vmem, size = 0x48000, scoped, tag = 'scratch operand']
  %s0 = inlined_call_operand.hbm [shape: f32[2,16,16,256], index: 0, kind: input, shape index: {}]
  %s1 = inlined_call_operand.vmem [shape: f32[3,3,256], index: 1, kind: input, shape index: {}]
  %s2 = inlined_call_operand.vmem [shape: f32[1,256], index: 2, kind: input, shape index: {}]
  %s3 = inlined_call_operand.hbm [shape: f32[2,16,16,256], index: 3, kind: output, shape index: {}]
  %s4 = sld [smem:[#allocation0]]
  $region49: #{dwconv_forward.1} parent=0
    _
  %s6 = ssub.s32 1, %s4
  %s7 = scalar_select 0, %s6, %s4
  $region1: #{dwconv_forward.1} parent=0
    #allocation3 [shape = 'u8[524288]{0}', space=vmem, size = 0x80000, scoped, tag = 'input window, operand 0']
    #allocation4 [shape = 's32[2]{0}', space=sflag, size = 0x8, scoped, tag = 'scoped memory for dwconv_forward.1']
    #allocation5 [shape = 's32[2]{0}', space=sflag, size = 0x8, scoped, tag = 'scoped memory for dwconv_forward.1']
    #allocation6 [shape = 'u8[524288]{0}', space=vmem, size = 0x80000, scoped, tag = 'output window, operand 0']
    %8 = vsyncpa [#allocation4], 0
    %s9 = scalar_lea.sflag [#allocation4], 1
    %10 = vsyncpa %s9, 0
    %11 = vsyncpa [#allocation5], 0
    %s12 = scalar_lea.sflag [#allocation5], 1
    %13 = vsyncpa %s12, 0
    loop: start=0, step=1, limit=4
    $region2: #{dwconv_forward.1} parent=1 // loop_pre_header
      _
    $region3: #{dwconv_forward.1} parent=1 // loop_header
      %s15 = sphi 0, %s19
      %p16 = scmp.ge.s32.totalorder %s15, 4
      %s22 = sphi 0, %s34
      %s23 = sphi 0, %s30
      %s24 = sphi 0, %s22
      %s25 = sphi 0, %s23
      %s26 = sphi 0, %s24
      %s27 = sphi 0, %s25
      %s39 = sphi 0, %s41
      %s42 = sphi 0, %s39
      %s43 = sphi 0, %s42
      %s59 = sphi 0, %s43
      %s65 = sphi 0, %s67
      %s68 = sphi 0, %s65
      %s69 = sphi 0, %s68
      %s85 = sphi 0, %s69
      %s91 = sphi 0, %s93
      %s94 = sphi 0, %s91
      %s95 = sphi 0, %s94
      %s111 = sphi 0, %s95
      %s119 = sphi 0, %s121
      %s122 = sphi 0, %s119
      %s123 = sphi 0, %s122
      %s139 = sphi 0, %s123
    $region4: #{dwconv_forward.1} parent=1 // loop_header_branch
      %18 = sbr.rel (%p16) target = $region8
    $region5: #{dwconv_forward.1} parent=1 // loop_body
      %s20 = ssub.s32 %s15, 1
      %s21 = ssub.s32 %s15, 2
      %s28 = sadd.s32 1, %s23
      %p29 = scmp.ge.s32.totalorder %s28, 2
      %s30 = scalar_select %p29, 0, %s28
      %s31 = sadd.s32 1, %s22
      %s32 = scalar_select %p29, %s31, %s22
      %p33 = scmp.ge.s32.totalorder %s32, 1
      %s34 = scalar_select %p33, 0, %s32
      %s35 = ssub.s32 %s23, %s30
      %s36 = ssub.s32 %s22, %s34
      %s37 = sor.u32 %s35, %s36
      %p38 = scmp.eq.s32.totalorder %s37, 0
      %s40 = sadd.s32 %s39, 1
      %s41 = scalar_select %p38, %s39, %s40
      %p44 = pneg %p38
      %p45 = scmp.eq.s32.totalorder %s15, 1
      %p46 = por %p44, %p45
      %p47 = scmp.ne.s32.totalorder %s39, %s42
      %p48 = scmp.eq.s32.totalorder %s15, 0
      %p49 = por %p47, %p48
      %p50 = scmp.ne.s32.totalorder %s39, %s42
      %p51 = scmp.eq.s32.totalorder %s20, 1
      %p52 = por %p50, %p51
      %p53 = scmp.ne.s32.totalorder %s42, %s43
      %p54 = scmp.eq.s32.totalorder %s20, 0
      %p55 = por %p53, %p54
      %p56 = scmp.ne.s32.totalorder %s42, %s43
      %p57 = scmp.eq.s32.totalorder %s21, 1
      %p58 = por %p56, %p57
      %p60 = scmp.ne.s32.totalorder %s43, %s59
      %p61 = scmp.eq.s32.totalorder %s21, 0
      %p62 = por %p60, %p61
      %s63 = ssub.s32 %s22, %s34
      %p64 = scmp.eq.s32.totalorder %s63, 0
      %s66 = sadd.s32 %s65, 1
      %s67 = scalar_select %p64, %s65, %s66
      %p70 = pneg %p64
      %p71 = scmp.eq.s32.totalorder %s15, 1
      %p72 = por %p70, %p71
      %p73 = scmp.ne.s32.totalorder %s65, %s68
      %p74 = scmp.eq.s32.totalorder %s15, 0
      %p75 = por %p73, %p74
      %p76 = scmp.ne.s32.totalorder %s65, %s68
      %p77 = scmp.eq.s32.totalorder %s20, 1
      %p78 = por %p76, %p77
      %p79 = scmp.ne.s32.totalorder %s68, %s69
      %p80 = scmp.eq.s32.totalorder %s20, 0
      %p81 = por %p79, %p80
      %p82 = scmp.ne.s32.totalorder %s68, %s69
      %p83 = scmp.eq.s32.totalorder %s21, 1
      %p84 = por %p82, %p83
      %p86 = scmp.ne.s32.totalorder %s69, %s85
      %p87 = scmp.eq.s32.totalorder %s21, 0
      %p88 = por %p86, %p87
      %s89 = ssub.s32 %s22, %s34
      %p90 = scmp.eq.s32.totalorder %s89, 0
      %s92 = sadd.s32 %s91, 1
      %s93 = scalar_select %p90, %s91, %s92
      %p96 = pneg %p90
      %p97 = scmp.eq.s32.totalorder %s15, 1
      %p98 = por %p96, %p97
      %p99 = scmp.ne.s32.totalorder %s91, %s94
      %p100 = scmp.eq.s32.totalorder %s15, 0
      %p101 = por %p99, %p100
      %p102 = scmp.ne.s32.totalorder %s91, %s94
      %p103 = scmp.eq.s32.totalorder %s20, 1
      %p104 = por %p102, %p103
      %p105 = scmp.ne.s32.totalorder %s94, %s95
      %p106 = scmp.eq.s32.totalorder %s20, 0
      %p107 = por %p105, %p106
      %p108 = scmp.ne.s32.totalorder %s94, %s95
      %p109 = scmp.eq.s32.totalorder %s21, 1
      %p110 = por %p108, %p109
      %p112 = scmp.ne.s32.totalorder %s95, %s111
      %p113 = scmp.eq.s32.totalorder %s21, 0
      %p114 = por %p112, %p113
      %s115 = ssub.s32 %s23, %s30
      %s116 = ssub.s32 %s22, %s34
      %s117 = sor.u32 %s115, %s116
      %p118 = scmp.eq.s32.totalorder %s117, 0
      %s120 = sadd.s32 %s119, 1
      %s121 = scalar_select %p118, %s119, %s120
      %p124 = pneg %p118
      %p125 = scmp.eq.s32.totalorder %s15, 1
      %p126 = por %p124, %p125
      %p127 = scmp.ne.s32.totalorder %s119, %s122
      %p128 = scmp.eq.s32.totalorder %s15, 0
      %p129 = por %p127, %p128
      %p130 = scmp.ne.s32.totalorder %s119, %s122
      %p131 = scmp.eq.s32.totalorder %s20, 1
      %p132 = por %p130, %p131
      %p133 = scmp.ne.s32.totalorder %s122, %s123
      %p134 = scmp.eq.s32.totalorder %s20, 0
      %p135 = por %p133, %p134
      %p136 = scmp.ne.s32.totalorder %s122, %s123
      %p137 = scmp.eq.s32.totalorder %s21, 1
      %p138 = por %p136, %p137
      %p140 = scmp.ne.s32.totalorder %s123, %s139
      %p141 = scmp.eq.s32.totalorder %s21, 0
      %p142 = por %p140, %p141
      %p143 = scmp.le.s32.totalorder 1, %s15
      %p144 = scmp.lt.s32.totalorder %s15, 3
      %p145 = pnand %p143, %p144
      %p146 = pneg %p145
      // Predicated region
      $region9: #{dwconv_forward.1} parent=5 // pred_check
        _
      $region10: #{dwconv_forward.1} parent=5 // pred_check_branch
        %148 = sbr.rel (%p145) target = $region12
      $region11: #{dwconv_forward.1} parent=5 // pred_region
        %s149 = ssub.s32 %s15, 1
        // Predicated region
        $region13: #{dwconv_forward.1} parent=11 // pred_check
          %p150 = pneg %p81
        $region14: #{dwconv_forward.1} parent=11 // pred_check_branch
          %152 = sbr.rel (%p150) target = $region16
        $region15: #{dwconv_forward.1} parent=11 // pred_region
          %s153 = smul.u32 2, %s24
          %p154 = scmp.lt.s32.totalorder %s153, 1
          %s155 = scalar_select %p154, %s153, 1
          %s156 = smul.addr %s155, 4
          %s157 = scalar_lea.vmem %s1, %s156
          %s158 = smul.u32 2, %s24
        $region16: #{dwconv_forward.1} parent=11 // pred_fallthru
          _
        // Predicated region
        $region17: #{dwconv_forward.1} parent=11 // pred_check
          %p159 = pneg %p107
        $region18: #{dwconv_forward.1} parent=11 // pred_check_branch
          %161 = sbr.rel (%p159) target = $region20
        $region19: #{dwconv_forward.1} parent=11 // pred_region
          %s162 = smul.u32 2, %s24
          %p163 = scmp.lt.s32.totalorder %s162, 1
          %s164 = scalar_select %p163, %s162, 1
          %s165 = scalar_lea.vmem %s2, %s164
          %s166 = smul.u32 2, %s24
        $region20: #{dwconv_forward.1} parent=11 // pred_fallthru
          _
      $region12: #{dwconv_forward.1} parent=5 // pred_fallthru
        _
      %p167 = scmp.lt.s32.totalorder %s15, 2
      // Predicated region
      $region21: #{dwconv_forward.1} parent=5 // pred_check
        %p168 = pneg %p167
      $region22: #{dwconv_forward.1} parent=5 // pred_check_branch
        %170 = sbr.rel (%p168) target = $region24
      $region23: #{dwconv_forward.1} parent=5 // pred_region
        // Predicated region
        $region25: #{dwconv_forward.1} parent=23 // pred_check
          %p171 = pneg %p49
        $region26: #{dwconv_forward.1} parent=23 // pred_check_branch
          %173 = sbr.rel (%p171) target = $region28
        $region27: #{dwconv_forward.1} parent=23 // pred_region
          %s174 = sand.u32 %s39, 1
          %s175 = scalar_lea.sflag [#allocation4], %s174
          %s176 = sand.u32 %s39, 1
          %s177 = smul.addr %s176, 512
          %s178 = scalar_lea.vmem [#allocation3], %s177
          %s179 = smul.u32 2, %s22
          %s181 = ssub.s32 8192, 8192
          %182 = vsyncadd %s175, %s181
          %s183 = smul.addr %s23, 64
          %s184 = sadd.s32 %s179, %s183
          %s185 = smul.addr %s184, 128
          %s186 = scalar_lea.hbm %s0, %s185
          %s187 = sshll.u32 %s178, 4
          %s188 = int_to_ptr.vmem [resolvable:$true] %s187
          %193 = dma.hbm_to_vmem [thread:$0]  %s186, 8192, %s188, %s175, 256, 256, 16
        $region28: #{dwconv_forward.1} parent=23 // pred_fallthru
          _
      $region24: #{dwconv_forward.1} parent=5 // pred_fallthru
        _
      %p194 = scmp.le.s32.totalorder 1, %s15
      %p195 = scmp.lt.s32.totalorder %s15, 3
      %p196 = pnand %p194, %p195
      %p197 = pneg %p196
      // Predicated region
      $region29: #{dwconv_forward.1} parent=5 // pred_check
        _
      $region30: #{dwconv_forward.1} parent=5 // pred_check_branch
        %199 = sbr.rel (%p196) target = $region32
      $region31: #{dwconv_forward.1} parent=5 // pred_region
        %s200 = ssub.s32 %s15, 1
        %s201 = sand.u32 %s42, 1
        %s202 = scalar_lea.sflag [#allocation4], %s201
        %s203 = sand.u32 %s42, 1
        %s204 = smul.addr %s203, 512
        %s205 = scalar_lea.vmem [#allocation3], %s204
        // Predicated region
        $region33: #{dwconv_forward.1} parent=31 // pred_check
          %p206 = pneg %p55
        $region34: #{dwconv_forward.1} parent=31 // pred_check_branch
          %208 = sbr.rel (%p206) target = $region36
        $region35: #{dwconv_forward.1} parent=31 // pred_region
          %209 = dma.done %s202, 8192
        $region36: #{dwconv_forward.1} parent=31 // pred_fallthru
          _
        %s210 = sand.u32 %s42, 1
        %s211 = scalar_lea.sflag [#allocation4], %s210
        %s212 = sand.u32 %s42, 1
        %s213 = smul.addr %s212, 512
        %s214 = scalar_lea.vmem [#allocation3], %s213
        %p215 = pneg %p55
        %p216 = pneg %p52
        %s217 = smul.u32 2, %s24
        %p218 = scmp.lt.s32.totalorder %s217, 1
        %s219 = scalar_select %p218, %s217, 1
        %s220 = smul.addr %s219, 4
        %s221 = scalar_lea.vmem %s1, %s220
        %p222 = pneg %p81
        %p223 = pneg %p78
        %s224 = smul.u32 2, %s24
        %p225 = scmp.lt.s32.totalorder %s224, 1
        %s226 = scalar_select %p225, %s224, 1
        %s227 = scalar_lea.vmem %s2, %s226
        %p228 = pneg %p107
        %p229 = pneg %p104
        %p230 = pneg %p135
        %p231 = pneg %p132
        %s232 = sand.u32 %s122, 1
        %s233 = scalar_lea.sflag [#allocation5], %s232
        %s234 = sand.u32 %s122, 1
        %s235 = smul.addr %s234, 512
        %s236 = scalar_lea.vmem [#allocation6], %s235
        %s237 = smul.u32 2, %s24
        %s238 = smul.u32 2, %s24
        %p239 = scmp.lt.s32.totalorder %s238, 1
        %s240 = scalar_select %p239, %s238, 1
        %s241 = smul.addr %s240, 4
        %s242 = scalar_lea.vmem %s1, %s241
        %s243 = smul.u32 2, %s24
        %s244 = smul.u32 2, %s24
        %p245 = scmp.lt.s32.totalorder %s244, 1
        %s246 = scalar_select %p245, %s244, 1
        %s247 = scalar_lea.vmem %s2, %s246
        %s248 = smul.u32 2, %s24
        %s249 = smul.u32 2, %s24
        %250 = vst [vmem:[#allocation2] sm:$0xff] 0.0
        %251 = vst [vmem:[#allocation2 + $0x8] sm:$0xff] 0.0
        %252 = vst [vmem:[#allocation2 + $0x10] sm:$0xff] 0.0
        %253 = vst [vmem:[#allocation2 + $0x18] sm:$0xff] 0.0
        %s254 = scalar_lea.vmem [#allocation2], 544
        %255 = vst [vmem:[%s254] sm:$0xff] 0.0
        %256 = vst [vmem:[%s254 + $0x8] sm:$0xff] 0.0
        %257 = vst [vmem:[%s254 + $0x10] sm:$0xff] 0.0
        %258 = vst [vmem:[%s254 + $0x18] sm:$0xff] 0.0
        %v259 = vld [vmem:[%s205] sm:$0xff]
        %v260 = vld [vmem:[%s205 + $0x8] sm:$0xff]
        %v261 = vld [vmem:[%s205 + $0x10] sm:$0xff]
        %v262 = vld [vmem:[%s205 + $0x18] sm:$0xff]
        %v263 = vld [vmem:[%s205 + $0x20] sm:$0xff]
        %v264 = vld [vmem:[%s205 + $0x28] sm:$0xff]
        %v265 = vld [vmem:[%s205 + $0x30] sm:$0xff]
        %v266 = vld [vmem:[%s205 + $0x38] sm:$0xff]
        %v267 = vld [vmem:[%s205 + $0x40] sm:$0xff]
        %v268 = vld [vmem:[%s205 + $0x48] sm:$0xff]
        %v269 = vld [vmem:[%s205 + $0x50] sm:$0xff]
        %v270 = vld [vmem:[%s205 + $0x58] sm:$0xff]
        %v271 = vld [vmem:[%s205 + $0x60] sm:$0xff]
        %v272 = vld [vmem:[%s205 + $0x68] sm:$0xff]
        %v273 = vld [vmem:[%s205 + $0x70] sm:$0xff]
        %v274 = vld [vmem:[%s205 + $0x78] sm:$0xff]
        %v275 = vld [vmem:[%s205 + $0x80] sm:$0xff]
        %v276 = vld [vmem:[%s205 + $0x88] sm:$0xff]
        %v277 = vld [vmem:[%s205 + $0x90] sm:$0xff]
        %v278 = vld [vmem:[%s205 + $0x98] sm:$0xff]
        %v279 = vld [vmem:[%s205 + $0xa0] sm:$0xff]
        %v280 = vld [vmem:[%s205 + $0xa8] sm:$0xff]
        %v281 = vld [vmem:[%s205 + $0xb0] sm:$0xff]
        %v282 = vld [vmem:[%s205 + $0xb8] sm:$0xff]
        %v283 = vld [vmem:[%s205 + $0xc0] sm:$0xff]
        %v284 = vld [vmem:[%s205 + $0xc8] sm:$0xff]
        %v285 = vld [vmem:[%s205 + $0xd0] sm:$0xff]
        %v286 = vld [vmem:[%s205 + $0xd8] sm:$0xff]
        %v287 = vld [vmem:[%s205 + $0xe0] sm:$0xff]
        %v288 = vld [vmem:[%s205 + $0xe8] sm:$0xff]
        %v289 = vld [vmem:[%s205 + $0xf0] sm:$0xff]
        %v290 = vld [vmem:[%s205 + $0xf8] sm:$0xff]
        %v291 = vld [vmem:[%s205 + $0x100] sm:$0xff]
        %v292 = vld [vmem:[%s205 + $0x108] sm:$0xff]
        %v293 = vld [vmem:[%s205 + $0x110] sm:$0xff]
        %v294 = vld [vmem:[%s205 + $0x118] sm:$0xff]
        %v295 = vld [vmem:[%s205 + $0x120] sm:$0xff]
        %v296 = vld [vmem:[%s205 + $0x128] sm:$0xff]
        %v297 = vld [vmem:[%s205 + $0x130] sm:$0xff]
        %v298 = vld [vmem:[%s205 + $0x138] sm:$0xff]
        %v299 = vld [vmem:[%s205 + $0x140] sm:$0xff]
        %v300 = vld [vmem:[%s205 + $0x148] sm:$0xff]
        %v301 = vld [vmem:[%s205 + $0x150] sm:$0xff]
        %v302 = vld [vmem:[%s205 + $0x158] sm:$0xff]
        %v303 = vld [vmem:[%s205 + $0x160] sm:$0xff]
        %v304 = vld [vmem:[%s205 + $0x168] sm:$0xff]
        %v305 = vld [vmem:[%s205 + $0x170] sm:$0xff]
        %v306 = vld [vmem:[%s205 + $0x178] sm:$0xff]
        %v307 = vld [vmem:[%s205 + $0x180] sm:$0xff]
        %v308 = vld [vmem:[%s205 + $0x188] sm:$0xff]
        %v309 = vld [vmem:[%s205 + $0x190] sm:$0xff]
        %v310 = vld [vmem:[%s205 + $0x198] sm:$0xff]
        %v311 = vld [vmem:[%s205 + $0x1a0] sm:$0xff]
        %v312 = vld [vmem:[%s205 + $0x1a8] sm:$0xff]
        %v313 = vld [vmem:[%s205 + $0x1b0] sm:$0xff]
        %v314 = vld [vmem:[%s205 + $0x1b8] sm:$0xff]
        %v315 = vld [vmem:[%s205 + $0x1c0] sm:$0xff]
        %v316 = vld [vmem:[%s205 + $0x1c8] sm:$0xff]
        %v317 = vld [vmem:[%s205 + $0x1d0] sm:$0xff]
        %v318 = vld [vmem:[%s205 + $0x1d8] sm:$0xff]
        %v319 = vld [vmem:[%s205 + $0x1e0] sm:$0xff]
        %v320 = vld [vmem:[%s205 + $0x1e8] sm:$0xff]
        %v321 = vld [vmem:[%s205 + $0x1f0] sm:$0xff]
        %v322 = vld [vmem:[%s205 + $0x1f8] sm:$0xff]
        %s323 = scalar_lea.vmem [#allocation2], 32
        %324 = vst [vmem:[%s323] sm:$0xff] %v259
        %325 = vst [vmem:[%s323 + $0x8] sm:$0xff] %v260
        %326 = vst [vmem:[%s323 + $0x10] sm:$0xff] %v261
        %327 = vst [vmem:[%s323 + $0x18] sm:$0xff] %v262
        %328 = vst [vmem:[%s323 + $0x20] sm:$0xff] %v263
        %329 = vst [vmem:[%s323 + $0x28] sm:$0xff] %v264
        %330 = vst [vmem:[%s323 + $0x30] sm:$0xff] %v265
        %331 = vst [vmem:[%s323 + $0x38] sm:$0xff] %v266
        %332 = vst [vmem:[%s323 + $0x40] sm:$0xff] %v267
        %333 = vst [vmem:[%s323 + $0x48] sm:$0xff] %v268
        %334 = vst [vmem:[%s323 + $0x50] sm:$0xff] %v269
        %335 = vst [vmem:[%s323 + $0x58] sm:$0xff] %v270
        %336 = vst [vmem:[%s323 + $0x60] sm:$0xff] %v271
        %337 = vst [vmem:[%s323 + $0x68] sm:$0xff] %v272
        %338 = vst [vmem:[%s323 + $0x70] sm:$0xff] %v273
        %339 = vst [vmem:[%s323 + $0x78] sm:$0xff] %v274
        %340 = vst [vmem:[%s323 + $0x80] sm:$0xff] %v275
        %341 = vst [vmem:[%s323 + $0x88] sm:$0xff] %v276
        %342 = vst [vmem:[%s323 + $0x90] sm:$0xff] %v277
        %343 = vst [vmem:[%s323 + $0x98] sm:$0xff] %v278
        %344 = vst [vmem:[%s323 + $0xa0] sm:$0xff] %v279
        %345 = vst [vmem:[%s323 + $0xa8] sm:$0xff] %v280
        %346 = vst [vmem:[%s323 + $0xb0] sm:$0xff] %v281
        %347 = vst [vmem:[%s323 + $0xb8] sm:$0xff] %v282
        %348 = vst [vmem:[%s323 + $0xc0] sm:$0xff] %v283
        %349 = vst [vmem:[%s323 + $0xc8] sm:$0xff] %v284
        %350 = vst [vmem:[%s323 + $0xd0] sm:$0xff] %v285
        %351 = vst [vmem:[%s323 + $0xd8] sm:$0xff] %v286
        %352 = vst [vmem:[%s323 + $0xe0] sm:$0xff] %v287
        %353 = vst [vmem:[%s323 + $0xe8] sm:$0xff] %v288
        %354 = vst [vmem:[%s323 + $0xf0] sm:$0xff] %v289
        %355 = vst [vmem:[%s323 + $0xf8] sm:$0xff] %v290
        %356 = vst [vmem:[%s323 + $0x100] sm:$0xff] %v291
        %357 = vst [vmem:[%s323 + $0x108] sm:$0xff] %v292
        %358 = vst [vmem:[%s323 + $0x110] sm:$0xff] %v293
        %359 = vst [vmem:[%s323 + $0x118] sm:$0xff] %v294
        %360 = vst [vmem:[%s323 + $0x120] sm:$0xff] %v295
        %361 = vst [vmem:[%s323 + $0x128] sm:$0xff] %v296
        %362 = vst [vmem:[%s323 + $0x130] sm:$0xff] %v297
        %363 = vst [vmem:[%s323 + $0x138] sm:$0xff] %v298
        %364 = vst [vmem:[%s323 + $0x140] sm:$0xff] %v299
        %365 = vst [vmem:[%s323 + $0x148] sm:$0xff] %v300
        %366 = vst [vmem:[%s323 + $0x150] sm:$0xff] %v301
        %367 = vst [vmem:[%s323 + $0x158] sm:$0xff] %v302
        %368 = vst [vmem:[%s323 + $0x160] sm:$0xff] %v303
        %369 = vst [vmem:[%s323 + $0x168] sm:$0xff] %v304
        %370 = vst [vmem:[%s323 + $0x170] sm:$0xff] %v305
        %371 = vst [vmem:[%s323 + $0x178] sm:$0xff] %v306
        %372 = vst [vmem:[%s323 + $0x180] sm:$0xff] %v307
        %373 = vst [vmem:[%s323 + $0x188] sm:$0xff] %v308
        %374 = vst [vmem:[%s323 + $0x190] sm:$0xff] %v309
        %375 = vst [vmem:[%s323 + $0x198] sm:$0xff] %v310
        %376 = vst [vmem:[%s323 + $0x1a0] sm:$0xff] %v311
        %377 = vst [vmem:[%s323 + $0x1a8] sm:$0xff] %v312
        %378 = vst [vmem:[%s323 + $0x1b0] sm:$0xff] %v313
        %379 = vst [vmem:[%s323 + $0x1b8] sm:$0xff] %v314
        %380 = vst [vmem:[%s323 + $0x1c0] sm:$0xff] %v315
        %381 = vst [vmem:[%s323 + $0x1c8] sm:$0xff] %v316
        %382 = vst [vmem:[%s323 + $0x1d0] sm:$0xff] %v317
        %383 = vst [vmem:[%s323 + $0x1d8] sm:$0xff] %v318
        %384 = vst [vmem:[%s323 + $0x1e0] sm:$0xff] %v319
        %385 = vst [vmem:[%s323 + $0x1e8] sm:$0xff] %v320
        %386 = vst [vmem:[%s323 + $0x1f0] sm:$0xff] %v321
        %387 = vst [vmem:[%s323 + $0x1f8] sm:$0xff] %v322
        %v388 = vld [vmem:[%s242] sm:$0x77]
        %v389 = vld [vmem:[%s242 + $0x8] sm:$0x77]
        %v390 = vld [vmem:[%s242 + $0x10] sm:$0x77]
        %v391 = vld [vmem:[%s247] sm:$0x3]
        %v392 = vld [vmem:[#allocation2] sm:$0xff]
        %v393 = vld [vmem:[#allocation2 + $0x8] sm:$0xff]
        %v394 = vld [vmem:[#allocation2 + $0x10] sm:$0xff]
        %v395 = vld [vmem:[#allocation2 + $0x18] sm:$0xff]
        %v396 = vld [vmem:[#allocation2 + $0x20] sm:$0xff]
        %v397 = vld [vmem:[#allocation2 + $0x28] sm:$0xff]
        %v398 = vld [vmem:[#allocation2 + $0x30] sm:$0xff]
        %v399 = vld [vmem:[#allocation2 + $0x38] sm:$0xff]
        %v400 = vld [vmem:[#allocation2 + $0x40] sm:$0xff]
        %v401 = vld [vmem:[#allocation2 + $0x48] sm:$0xff]
        %v402 = vld [vmem:[#allocation2 + $0x50] sm:$0xff]
        %v403 = vld [vmem:[#allocation2 + $0x58] sm:$0xff]
        %v404 = vld [vmem:[#allocation2 + $0x60] sm:$0xff]
        %v405 = vld [vmem:[#allocation2 + $0x68] sm:$0xff]
        %v406 = vld [vmem:[#allocation2 + $0x70] sm:$0xff]
        %v407 = vld [vmem:[#allocation2 + $0x78] sm:$0xff]
        %v408 = vld [vmem:[#allocation2 + $0x80] sm:$0xff]
        %v409 = vld [vmem:[#allocation2 + $0x88] sm:$0xff]
        %v410 = vld [vmem:[#allocation2 + $0x90] sm:$0xff]
        %v411 = vld [vmem:[#allocation2 + $0x98] sm:$0xff]
        %v412 = vld [vmem:[#allocation2 + $0xa0] sm:$0xff]
        %v413 = vld [vmem:[#allocation2 + $0xa8] sm:$0xff]
        %v414 = vld [vmem:[#allocation2 + $0xb0] sm:$0xff]
        %v415 = vld [vmem:[#allocation2 + $0xb8] sm:$0xff]
        %v416 = vld [vmem:[#allocation2 + $0xc0] sm:$0xff]
        %v417 = vld [vmem:[#allocation2 + $0xc8] sm:$0xff]
        %v418 = vld [vmem:[#allocation2 + $0xd0] sm:$0xff]
        %v419 = vld [vmem:[#allocation2 + $0xd8] sm:$0xff]
        %v420 = vld [vmem:[#allocation2 + $0xe0] sm:$0xff]
        %v421 = vld [vmem:[#allocation2 + $0xe8] sm:$0xff]
        %v422 = vld [vmem:[#allocation2 + $0xf0] sm:$0xff]
        %v423 = vld [vmem:[#allocation2 + $0xf8] sm:$0xff]
        %v424 = vld [vmem:[#allocation2 + $0x100] sm:$0xff]
        %v425 = vld [vmem:[#allocation2 + $0x108] sm:$0xff]
        %v426 = vld [vmem:[#allocation2 + $0x110] sm:$0xff]
        %v427 = vld [vmem:[#allocation2 + $0x118] sm:$0xff]
        %v428 = vld [vmem:[#allocation2 + $0x120] sm:$0xff]
        %v429 = vld [vmem:[#allocation2 + $0x128] sm:$0xff]
        %v430 = vld [vmem:[#allocation2 + $0x130] sm:$0xff]
        %v431 = vld [vmem:[#allocation2 + $0x138] sm:$0xff]
        %v432 = vld [vmem:[#allocation2 + $0x140] sm:$0xff]
        %v433 = vld [vmem:[#allocation2 + $0x148] sm:$0xff]
        %v434 = vld [vmem:[#allocation2 + $0x150] sm:$0xff]
        %v435 = vld [vmem:[#allocation2 + $0x158] sm:$0xff]
        %v436 = vld [vmem:[#allocation2 + $0x160] sm:$0xff]
        %v437 = vld [vmem:[#allocation2 + $0x168] sm:$0xff]
        %v438 = vld [vmem:[#allocation2 + $0x170] sm:$0xff]
        %v439 = vld [vmem:[#allocation2 + $0x178] sm:$0xff]
        %v440 = vld [vmem:[#allocation2 + $0x180] sm:$0xff]
        %v441 = vld [vmem:[#allocation2 + $0x188] sm:$0xff]
        %v442 = vld [vmem:[#allocation2 + $0x190] sm:$0xff]
        %v443 = vld [vmem:[#allocation2 + $0x198] sm:$0xff]
        %v444 = vld [vmem:[#allocation2 + $0x1a0] sm:$0xff]
        %v445 = vld [vmem:[#allocation2 + $0x1a8] sm:$0xff]
        %v446 = vld [vmem:[#allocation2 + $0x1b0] sm:$0xff]
        %v447 = vld [vmem:[#allocation2 + $0x1b8] sm:$0xff]
        %v448 = vld [vmem:[#allocation2 + $0x1c0] sm:$0xff]
        %v449 = vld [vmem:[#allocation2 + $0x1c8] sm:$0xff]
        %v450 = vld [vmem:[#allocation2 + $0x1d0] sm:$0xff]
        %v451 = vld [vmem:[#allocation2 + $0x1d8] sm:$0xff]
        %v452 = vld [vmem:[#allocation2 + $0x1e0] sm:$0xff]
        %v453 = vld [vmem:[#allocation2 + $0x1e8] sm:$0xff]
        %v454 = vld [vmem:[#allocation2 + $0x1f0] sm:$0xff]
        %v455 = vld [vmem:[#allocation2 + $0x1f8] sm:$0xff]
        %v456 = vld [vmem:[%s323] sm:$0xff]
        %v457 = vld [vmem:[%s323 + $0x8] sm:$0xff]
        %v458 = vld [vmem:[%s323 + $0x10] sm:$0xff]
        %v459 = vld [vmem:[%s323 + $0x18] sm:$0xff]
        %v460 = vld [vmem:[%s323 + $0x20] sm:$0xff]
        %v461 = vld [vmem:[%s323 + $0x28] sm:$0xff]
        %v462 = vld [vmem:[%s323 + $0x30] sm:$0xff]
        %v463 = vld [vmem:[%s323 + $0x38] sm:$0xff]
        %v464 = vld [vmem:[%s323 + $0x40] sm:$0xff]
        %v465 = vld [vmem:[%s323 + $0x48] sm:$0xff]
        %v466 = vld [vmem:[%s323 + $0x50] sm:$0xff]
        %v467 = vld [vmem:[%s323 + $0x58] sm:$0xff]
        %v468 = vld [vmem:[%s323 + $0x60] sm:$0xff]
        %v469 = vld [vmem:[%s323 + $0x68] sm:$0xff]
        %v470 = vld [vmem:[%s323 + $0x70] sm:$0xff]
        %v471 = vld [vmem:[%s323 + $0x78] sm:$0xff]
        %v472 = vld [vmem:[%s323 + $0x80] sm:$0xff]
        %v473 = vld [vmem:[%s323 + $0x88] sm:$0xff]
        %v474 = vld [vmem:[%s323 + $0x90] sm:$0xff]
        %v475 = vld [vmem:[%s323 + $0x98] sm:$0xff]
        %v476 = vld [vmem:[%s323 + $0xa0] sm:$0xff]
        %v477 = vld [vmem:[%s323 + $0xa8] sm:$0xff]
        %v478 = vld [vmem:[%s323 + $0xb0] sm:$0xff]
        %v479 = vld [vmem:[%s323 + $0xb8] sm:$0xff]
        %v480 = vld [vmem:[%s323 + $0xc0] sm:$0xff]
        %v481 = vld [vmem:[%s323 + $0xc8] sm:$0xff]
        %v482 = vld [vmem:[%s323 + $0xd0] sm:$0xff]
        %v483 = vld [vmem:[%s323 + $0xd8] sm:$0xff]
        %v484 = vld [vmem:[%s323 + $0xe0] sm:$0xff]
        %v485 = vld [vmem:[%s323 + $0xe8] sm:$0xff]
        %v486 = vld [vmem:[%s323 + $0xf0] sm:$0xff]
        %v487 = vld [vmem:[%s323 + $0xf8] sm:$0xff]
        %v488 = vld [vmem:[%s323 + $0x100] sm:$0xff]
        %v489 = vld [vmem:[%s323 + $0x108] sm:$0xff]
        %v490 = vld [vmem:[%s323 + $0x110] sm:$0xff]
        %v491 = vld [vmem:[%s323 + $0x118] sm:$0xff]
        %v492 = vld [vmem:[%s323 + $0x120] sm:$0xff]
        %v493 = vld [vmem:[%s323 + $0x128] sm:$0xff]
        %v494 = vld [vmem:[%s323 + $0x130] sm:$0xff]
        %v495 = vld [vmem:[%s323 + $0x138] sm:$0xff]
        %v496 = vld [vmem:[%s323 + $0x140] sm:$0xff]
        %v497 = vld [vmem:[%s323 + $0x148] sm:$0xff]
        %v498 = vld [vmem:[%s323 + $0x150] sm:$0xff]
        %v499 = vld [vmem:[%s323 + $0x158] sm:$0xff]
        %v500 = vld [vmem:[%s323 + $0x160] sm:$0xff]
        %v501 = vld [vmem:[%s323 + $0x168] sm:$0xff]
        %v502 = vld [vmem:[%s323 + $0x170] sm:$0xff]
        %v503 = vld [vmem:[%s323 + $0x178] sm:$0xff]
        %v504 = vld [vmem:[%s323 + $0x180] sm:$0xff]
        %v505 = vld [vmem:[%s323 + $0x188] sm:$0xff]
        %v506 = vld [vmem:[%s323 + $0x190] sm:$0xff]
        %v507 = vld [vmem:[%s323 + $0x198] sm:$0xff]
        %v508 = vld [vmem:[%s323 + $0x1a0] sm:$0xff]
        %v509 = vld [vmem:[%s323 + $0x1a8] sm:$0xff]
        %v510 = vld [vmem:[%s323 + $0x1b0] sm:$0xff]
        %v511 = vld [vmem:[%s323 + $0x1b8] sm:$0xff]
        %v512 = vld [vmem:[%s323 + $0x1c0] sm:$0xff]
        %v513 = vld [vmem:[%s323 + $0x1c8] sm:$0xff]
        %v514 = vld [vmem:[%s323 + $0x1d0] sm:$0xff]
        %v515 = vld [vmem:[%s323 + $0x1d8] sm:$0xff]
        %v516 = vld [vmem:[%s323 + $0x1e0] sm:$0xff]
        %v517 = vld [vmem:[%s323 + $0x1e8] sm:$0xff]
        %v518 = vld [vmem:[%s323 + $0x1f0] sm:$0xff]
        %v519 = vld [vmem:[%s323 + $0x1f8] sm:$0xff]
        %s520 = scalar_lea.vmem [#allocation2], 64
        %v521 = vld [vmem:[%s520] sm:$0xff]
        %v522 = vld [vmem:[%s520 + $0x8] sm:$0xff]
        %v523 = vld [vmem:[%s520 + $0x10] sm:$0xff]
        %v524 = vld [vmem:[%s520 + $0x18] sm:$0xff]
        %v525 = vld [vmem:[%s520 + $0x20] sm:$0xff]
        %v526 = vld [vmem:[%s520 + $0x28] sm:$0xff]
        %v527 = vld [vmem:[%s520 + $0x30] sm:$0xff]
        %v528 = vld [vmem:[%s520 + $0x38] sm:$0xff]
        %v529 = vld [vmem:[%s520 + $0x40] sm:$0xff]
        %v530 = vld [vmem:[%s520 + $0x48] sm:$0xff]
        %v531 = vld [vmem:[%s520 + $0x50] sm:$0xff]
        %v532 = vld [vmem:[%s520 + $0x58] sm:$0xff]
        %v533 = vld [vmem:[%s520 + $0x60] sm:$0xff]
        %v534 = vld [vmem:[%s520 + $0x68] sm:$0xff]
        %v535 = vld [vmem:[%s520 + $0x70] sm:$0xff]
        %v536 = vld [vmem:[%s520 + $0x78] sm:$0xff]
        %v537 = vld [vmem:[%s520 + $0x80] sm:$0xff]
        %v538 = vld [vmem:[%s520 + $0x88] sm:$0xff]
        %v539 = vld [vmem:[%s520 + $0x90] sm:$0xff]
        %v540 = vld [vmem:[%s520 + $0x98] sm:$0xff]
        %v541 = vld [vmem:[%s520 + $0xa0] sm:$0xff]
        %v542 = vld [vmem:[%s520 + $0xa8] sm:$0xff]
        %v543 = vld [vmem:[%s520 + $0xb0] sm:$0xff]
        %v544 = vld [vmem:[%s520 + $0xb8] sm:$0xff]
        %v545 = vld [vmem:[%s520 + $0xc0] sm:$0xff]
        %v546 = vld [vmem:[%s520 + $0xc8] sm:$0xff]
        %v547 = vld [vmem:[%s520 + $0xd0] sm:$0xff]
        %v548 = vld [vmem:[%s520 + $0xd8] sm:$0xff]
        %v549 = vld [vmem:[%s520 + $0xe0] sm:$0xff]
        %v550 = vld [vmem:[%s520 + $0xe8] sm:$0xff]
        %v551 = vld [vmem:[%s520 + $0xf0] sm:$0xff]
        %v552 = vld [vmem:[%s520 + $0xf8] sm:$0xff]
        %v553 = vld [vmem:[%s520 + $0x100] sm:$0xff]
        %v554 = vld [vmem:[%s520 + $0x108] sm:$0xff]
        %v555 = vld [vmem:[%s520 + $0x110] sm:$0xff]
        %v556 = vld [vmem:[%s520 + $0x118] sm:$0xff]
        %v557 = vld [vmem:[%s520 + $0x120] sm:$0xff]
        %v558 = vld [vmem:[%s520 + $0x128] sm:$0xff]
        %v559 = vld [vmem:[%s520 + $0x130] sm:$0xff]
        %v560 = vld [vmem:[%s520 + $0x138] sm:$0xff]
        %v561 = vld [vmem:[%s520 + $0x140] sm:$0xff]
        %v562 = vld [vmem:[%s520 + $0x148] sm:$0xff]
        %v563 = vld [vmem:[%s520 + $0x150] sm:$0xff]
        %v564 = vld [vmem:[%s520 + $0x158] sm:$0xff]
        %v565 = vld [vmem:[%s520 + $0x160] sm:$0xff]
        %v566 = vld [vmem:[%s520 + $0x168] sm:$0xff]
        %v567 = vld [vmem:[%s520 + $0x170] sm:$0xff]
        %v568 = vld [vmem:[%s520 + $0x178] sm:$0xff]
        %v569 = vld [vmem:[%s520 + $0x180] sm:$0xff]
        %v570 = vld [vmem:[%s520 + $0x188] sm:$0xff]
        %v571 = vld [vmem:[%s520 + $0x190] sm:$0xff]
        %v572 = vld [vmem:[%s520 + $0x198] sm:$0xff]
        %v573 = vld [vmem:[%s520 + $0x1a0] sm:$0xff]
        %v574 = vld [vmem:[%s520 + $0x1a8] sm:$0xff]
        %v575 = vld [vmem:[%s520 + $0x1b0] sm:$0xff]
        %v576 = vld [vmem:[%s520 + $0x1b8] sm:$0xff]
        %v577 = vld [vmem:[%s520 + $0x1c0] sm:$0xff]
        %v578 = vld [vmem:[%s520 + $0x1c8] sm:$0xff]
        %v579 = vld [vmem:[%s520 + $0x1d0] sm:$0xff]
        %v580 = vld [vmem:[%s520 + $0x1d8] sm:$0xff]
        %v581 = vld [vmem:[%s520 + $0x1e0] sm:$0xff]
        %v582 = vld [vmem:[%s520 + $0x1e8] sm:$0xff]
        %v583 = vld [vmem:[%s520 + $0x1f0] sm:$0xff]
        %v584 = vld [vmem:[%s520 + $0x1f8] sm:$0xff]
        %v586 = vlaneseq
        %v587 = vshrl.u32 %v586, 7
        %v588 = vsub.s32 1, %v587
        %v589 = vrot.slane %v388, %v588
        %v590 = vlaneseq
        %v591 = vshrl.u32 %v590, 7
        %v592 = vsub.s32 5, %v591
        %v593 = vrot.slane %v388, %v592
        %v596 = vlaneseq
        %v597 = vshrl.u32 %v596, 7
        %v598 = vsub.s32 1, %v597
        %v599 = vrot.slane %v589, %v598
        %v600 = vlaneseq
        %v601 = vshrl.u32 %v600, 7
        %v602 = vsub.s32 1, %v601
        %v603 = vrot.slane %v593, %v602
        %v604 = vmul.f32 %v392, %v599
        %v605 = vmul.f32 %v393, %v603
        %v606 = vmul.f32 %v394, %v599
        %v607 = vmul.f32 %v395, %v603
        %v608 = vmul.f32 %v396, %v599
        %v609 = vmul.f32 %v397, %v603
        %v610 = vmul.f32 %v398, %v599
        %v611 = vmul.f32 %v399, %v603
        %v612 = vmul.f32 %v400, %v599
        %v613 = vmul.f32 %v401, %v603
        %v614 = vmul.f32 %v402, %v599
        %v615 = vmul.f32 %v403, %v603
        %v616 = vmul.f32 %v404, %v599
        %v617 = vmul.f32 %v405, %v603
        %v618 = vmul.f32 %v406, %v599
        %v619 = vmul.f32 %v407, %v603
        %v620 = vmul.f32 %v408, %v599
        %v621 = vmul.f32 %v409, %v603
        %v622 = vmul.f32 %v410, %v599
        %v623 = vmul.f32 %v411, %v603
        %v624 = vmul.f32 %v412, %v599
        %v625 = vmul.f32 %v413, %v603
        %v626 = vmul.f32 %v414, %v599
        %v627 = vmul.f32 %v415, %v603
        %v628 = vmul.f32 %v416, %v599
        %v629 = vmul.f32 %v417, %v603
        %v630 = vmul.f32 %v418, %v599
        %v631 = vmul.f32 %v419, %v603
        %v632 = vmul.f32 %v420, %v599
        %v633 = vmul.f32 %v421, %v603
        %v634 = vmul.f32 %v422, %v599
        %v635 = vmul.f32 %v423, %v603
        %v636 = vmul.f32 %v424, %v599
        %v637 = vmul.f32 %v425, %v603
        %v638 = vmul.f32 %v426, %v599
        %v639 = vmul.f32 %v427, %v603
        %v640 = vmul.f32 %v428, %v599
        %v641 = vmul.f32 %v429, %v603
        %v642 = vmul.f32 %v430, %v599
        %v643 = vmul.f32 %v431, %v603
        %v644 = vmul.f32 %v432, %v599
        %v645 = vmul.f32 %v433, %v603
        %v646 = vmul.f32 %v434, %v599
        %v647 = vmul.f32 %v435, %v603
        %v648 = vmul.f32 %v436, %v599
        %v649 = vmul.f32 %v437, %v603
        %v650 = vmul.f32 %v438, %v599
        %v651 = vmul.f32 %v439, %v603
        %v652 = vmul.f32 %v440, %v599
        %v653 = vmul.f32 %v441, %v603
        %v654 = vmul.f32 %v442, %v599
        %v655 = vmul.f32 %v443, %v603
        %v656 = vmul.f32 %v444, %v599
        %v657 = vmul.f32 %v445, %v603
        %v658 = vmul.f32 %v446, %v599
        %v659 = vmul.f32 %v447, %v603
        %v660 = vmul.f32 %v448, %v599
        %v661 = vmul.f32 %v449, %v603
        %v662 = vmul.f32 %v450, %v599
        %v663 = vmul.f32 %v451, %v603
        %v664 = vmul.f32 %v452, %v599
        %v665 = vmul.f32 %v453, %v603
        %v666 = vmul.f32 %v454, %v599
        %v667 = vmul.f32 %v455, %v603
        %v669 = vlaneseq
        %v670 = vshrl.u32 %v669, 7
        %v671 = vsub.s32 1, %v670
        %v672 = vrot.slane %v389, %v671
        %v673 = vlaneseq
        %v674 = vshrl.u32 %v673, 7
        %v675 = vsub.s32 5, %v674
        %v676 = vrot.slane %v389, %v675
        %v679 = vlaneseq
        %v680 = vshrl.u32 %v679, 7
        %v681 = vsub.s32 1, %v680
        %v682 = vrot.slane %v672, %v681
        %v683 = vlaneseq
        %v684 = vshrl.u32 %v683, 7
        %v685 = vsub.s32 1, %v684
        %v686 = vrot.slane %v676, %v685
        %v687 = vmul.f32 %v456, %v682
        %v688 = vmul.f32 %v457, %v686
        %v689 = vmul.f32 %v458, %v682
        %v690 = vmul.f32 %v459, %v686
        %v691 = vmul.f32 %v460, %v682
        %v692 = vmul.f32 %v461, %v686
        %v693 = vmul.f32 %v462, %v682
        %v694 = vmul.f32 %v463, %v686
        %v695 = vmul.f32 %v464, %v682
        %v696 = vmul.f32 %v465, %v686
        %v697 = vmul.f32 %v466, %v682
        %v698 = vmul.f32 %v467, %v686
        %v699 = vmul.f32 %v468, %v682
        %v700 = vmul.f32 %v469, %v686
        %v701 = vmul.f32 %v470, %v682
        %v702 = vmul.f32 %v471, %v686
        %v703 = vmul.f32 %v472, %v682
        %v704 = vmul.f32 %v473, %v686
        %v705 = vmul.f32 %v474, %v682
        %v706 = vmul.f32 %v475, %v686
        %v707 = vmul.f32 %v476, %v682
        %v708 = vmul.f32 %v477, %v686
        %v709 = vmul.f32 %v478, %v682
        %v710 = vmul.f32 %v479, %v686
        %v711 = vmul.f32 %v480, %v682
        %v712 = vmul.f32 %v481, %v686
        %v713 = vmul.f32 %v482, %v682
        %v714 = vmul.f32 %v483, %v686
        %v715 = vmul.f32 %v484, %v682
        %v716 = vmul.f32 %v485, %v686
        %v717 = vmul.f32 %v486, %v682
        %v718 = vmul.f32 %v487, %v686
        %v719 = vmul.f32 %v488, %v682
        %v720 = vmul.f32 %v489, %v686
        %v721 = vmul.f32 %v490, %v682
        %v722 = vmul.f32 %v491, %v686
        %v723 = vmul.f32 %v492, %v682
        %v724 = vmul.f32 %v493, %v686
        %v725 = vmul.f32 %v494, %v682
        %v726 = vmul.f32 %v495, %v686
        %v727 = vmul.f32 %v496, %v682
        %v728 = vmul.f32 %v497, %v686
        %v729 = vmul.f32 %v498, %v682
        %v730 = vmul.f32 %v499, %v686
        %v731 = vmul.f32 %v500, %v682
        %v732 = vmul.f32 %v501, %v686
        %v733 = vmul.f32 %v502, %v682
        %v734 = vmul.f32 %v503, %v686
        %v735 = vmul.f32 %v504, %v682
        %v736 = vmul.f32 %v505, %v686
        %v737 = vmul.f32 %v506, %v682
        %v738 = vmul.f32 %v507, %v686
        %v739 = vmul.f32 %v508, %v682
        %v740 = vmul.f32 %v509, %v686
        %v741 = vmul.f32 %v510, %v682
        %v742 = vmul.f32 %v511, %v686
        %v743 = vmul.f32 %v512, %v682
        %v744 = vmul.f32 %v513, %v686
        %v745 = vmul.f32 %v514, %v682
        %v746 = vmul.f32 %v515, %v686
        %v747 = vmul.f32 %v516, %v682
        %v748 = vmul.f32 %v517, %v686
        %v749 = vmul.f32 %v518, %v682
        %v750 = vmul.f32 %v519, %v686
        %v751 = vadd.f32 %v604, %v687
        %v752 = vadd.f32 %v605, %v688
        %v753 = vadd.f32 %v606, %v689
        %v754 = vadd.f32 %v607, %v690
        %v755 = vadd.f32 %v608, %v691
        %v756 = vadd.f32 %v609, %v692
        %v757 = vadd.f32 %v610, %v693
        %v758 = vadd.f32 %v611, %v694
        %v759 = vadd.f32 %v612, %v695
        %v760 = vadd.f32 %v613, %v696
        %v761 = vadd.f32 %v614, %v697
        %v762 = vadd.f32 %v615, %v698
        %v763 = vadd.f32 %v616, %v699
        %v764 = vadd.f32 %v617, %v700
        %v765 = vadd.f32 %v618, %v701
        %v766 = vadd.f32 %v619, %v702
        %v767 = vadd.f32 %v620, %v703
        %v768 = vadd.f32 %v621, %v704
        %v769 = vadd.f32 %v622, %v705
        %v770 = vadd.f32 %v623, %v706
        %v771 = vadd.f32 %v624, %v707
        %v772 = vadd.f32 %v625, %v708
        %v773 = vadd.f32 %v626, %v709
        %v774 = vadd.f32 %v627, %v710
        %v775 = vadd.f32 %v628, %v711
        %v776 = vadd.f32 %v629, %v712
        %v777 = vadd.f32 %v630, %v713
        %v778 = vadd.f32 %v631, %v714
        %v779 = vadd.f32 %v632, %v715
        %v780 = vadd.f32 %v633, %v716
        %v781 = vadd.f32 %v634, %v717
        %v782 = vadd.f32 %v635, %v718
        %v783 = vadd.f32 %v636, %v719
        %v784 = vadd.f32 %v637, %v720
        %v785 = vadd.f32 %v638, %v721
        %v786 = vadd.f32 %v639, %v722
        %v787 = vadd.f32 %v640, %v723
        %v788 = vadd.f32 %v641, %v724
        %v789 = vadd.f32 %v642, %v725
        %v790 = vadd.f32 %v643, %v726
        %v791 = vadd.f32 %v644, %v727
        %v792 = vadd.f32 %v645, %v728
        %v793 = vadd.f32 %v646, %v729
        %v794 = vadd.f32 %v647, %v730
        %v795 = vadd.f32 %v648, %v731
        %v796 = vadd.f32 %v649, %v732
        %v797 = vadd.f32 %v650, %v733
        %v798 = vadd.f32 %v651, %v734
        %v799 = vadd.f32 %v652, %v735
        %v800 = vadd.f32 %v653, %v736
        %v801 = vadd.f32 %v654, %v737
        %v802 = vadd.f32 %v655, %v738
        %v803 = vadd.f32 %v656, %v739
        %v804 = vadd.f32 %v657, %v740
        %v805 = vadd.f32 %v658, %v741
        %v806 = vadd.f32 %v659, %v742
        %v807 = vadd.f32 %v660, %v743
        %v808 = vadd.f32 %v661, %v744
        %v809 = vadd.f32 %v662, %v745
        %v810 = vadd.f32 %v663, %v746
        %v811 = vadd.f32 %v664, %v747
        %v812 = vadd.f32 %v665, %v748
        %v813 = vadd.f32 %v666, %v749
        %v814 = vadd.f32 %v667, %v750
        %v816 = vlaneseq
        %v817 = vshrl.u32 %v816, 7
        %v818 = vsub.s32 1, %v817
        %v819 = vrot.slane %v390, %v818
        %v820 = vlaneseq
        %v821 = vshrl.u32 %v820, 7
        %v822 = vsub.s32 5, %v821
        %v823 = vrot.slane %v390, %v822
        %v826 = vlaneseq
        %v827 = vshrl.u32 %v826, 7
        %v828 = vsub.s32 1, %v827
        %v829 = vrot.slane %v819, %v828
        %v830 = vlaneseq
        %v831 = vshrl.u32 %v830, 7
        %v832 = vsub.s32 1, %v831
        %v833 = vrot.slane %v823, %v832
        %v834 = vmul.f32 %v521, %v829
        %v835 = vmul.f32 %v522, %v833
        %v836 = vmul.f32 %v523, %v829
        %v837 = vmul.f32 %v524, %v833
        %v838 = vmul.f32 %v525, %v829
        %v839 = vmul.f32 %v526, %v833
        %v840 = vmul.f32 %v527, %v829
        %v841 = vmul.f32 %v528, %v833
        %v842 = vmul.f32 %v529, %v829
        %v843 = vmul.f32 %v530, %v833
        %v844 = vmul.f32 %v531, %v829
        %v845 = vmul.f32 %v532, %v833
        %v846 = vmul.f32 %v533, %v829
        %v847 = vmul.f32 %v534, %v833
        %v848 = vmul.f32 %v535, %v829
        %v849 = vmul.f32 %v536, %v833
        %v850 = vmul.f32 %v537, %v829
        %v851 = vmul.f32 %v538, %v833
        %v852 = vmul.f32 %v539, %v829
        %v853 = vmul.f32 %v540, %v833
        %v854 = vmul.f32 %v541, %v829
        %v855 = vmul.f32 %v542, %v833
        %v856 = vmul.f32 %v543, %v829
        %v857 = vmul.f32 %v544, %v833
        %v858 = vmul.f32 %v545, %v829
        %v859 = vmul.f32 %v546, %v833
        %v860 = vmul.f32 %v547, %v829
        %v861 = vmul.f32 %v548, %v833
        %v862 = vmul.f32 %v549, %v829
        %v863 = vmul.f32 %v550, %v833
        %v864 = vmul.f32 %v551, %v829
        %v865 = vmul.f32 %v552, %v833
        %v866 = vmul.f32 %v553, %v829
        %v867 = vmul.f32 %v554, %v833
        %v868 = vmul.f32 %v555, %v829
        %v869 = vmul.f32 %v556, %v833
        %v870 = vmul.f32 %v557, %v829
        %v871 = vmul.f32 %v558, %v833
        %v872 = vmul.f32 %v559, %v829
        %v873 = vmul.f32 %v560, %v833
        %v874 = vmul.f32 %v561, %v829
        %v875 = vmul.f32 %v562, %v833
        %v876 = vmul.f32 %v563, %v829
        %v877 = vmul.f32 %v564, %v833
        %v878 = vmul.f32 %v565, %v829
        %v879 = vmul.f32 %v566, %v833
        %v880 = vmul.f32 %v567, %v829
        %v881 = vmul.f32 %v568, %v833
        %v882 = vmul.f32 %v569, %v829
        %v883 = vmul.f32 %v570, %v833
        %v884 = vmul.f32 %v571, %v829
        %v885 = vmul.f32 %v572, %v833
        %v886 = vmul.f32 %v573, %v829
        %v887 = vmul.f32 %v574, %v833
        %v888 = vmul.f32 %v575, %v829
        %v889 = vmul.f32 %v576, %v833
        %v890 = vmul.f32 %v577, %v829
        %v891 = vmul.f32 %v578, %v833
        %v892 = vmul.f32 %v579, %v829
        %v893 = vmul.f32 %v580, %v833
        %v894 = vmul.f32 %v581, %v829
        %v895 = vmul.f32 %v582, %v833
        %v896 = vmul.f32 %v583, %v829
        %v897 = vmul.f32 %v584, %v833
        %v898 = vadd.f32 %v751, %v834
        %v899 = vadd.f32 %v752, %v835
        %v900 = vadd.f32 %v753, %v836
        %v901 = vadd.f32 %v754, %v837
        %v902 = vadd.f32 %v755, %v838
        %v903 = vadd.f32 %v756, %v839
        %v904 = vadd.f32 %v757, %v840
        %v905 = vadd.f32 %v758, %v841
        %v906 = vadd.f32 %v759, %v842
        %v907 = vadd.f32 %v760, %v843
        %v908 = vadd.f32 %v761, %v844
        %v909 = vadd.f32 %v762, %v845
        %v910 = vadd.f32 %v763, %v846
        %v911 = vadd.f32 %v764, %v847
        %v912 = vadd.f32 %v765, %v848
        %v913 = vadd.f32 %v766, %v849
        %v914 = vadd.f32 %v767, %v850
        %v915 = vadd.f32 %v768, %v851
        %v916 = vadd.f32 %v769, %v852
        %v917 = vadd.f32 %v770, %v853
        %v918 = vadd.f32 %v771, %v854
        %v919 = vadd.f32 %v772, %v855
        %v920 = vadd.f32 %v773, %v856
        %v921 = vadd.f32 %v774, %v857
        %v922 = vadd.f32 %v775, %v858
        %v923 = vadd.f32 %v776, %v859
        %v924 = vadd.f32 %v777, %v860
        %v925 = vadd.f32 %v778, %v861
        %v926 = vadd.f32 %v779, %v862
        %v927 = vadd.f32 %v780, %v863
        %v928 = vadd.f32 %v781, %v864
        %v929 = vadd.f32 %v782, %v865
        %v930 = vadd.f32 %v783, %v866
        %v931 = vadd.f32 %v784, %v867
        %v932 = vadd.f32 %v785, %v868
        %v933 = vadd.f32 %v786, %v869
        %v934 = vadd.f32 %v787, %v870
        %v935 = vadd.f32 %v788, %v871
        %v936 = vadd.f32 %v789, %v872
        %v937 = vadd.f32 %v790, %v873
        %v938 = vadd.f32 %v791, %v874
        %v939 = vadd.f32 %v792, %v875
        %v940 = vadd.f32 %v793, %v876
        %v941 = vadd.f32 %v794, %v877
        %v942 = vadd.f32 %v795, %v878
        %v943 = vadd.f32 %v796, %v879
        %v944 = vadd.f32 %v797, %v880
        %v945 = vadd.f32 %v798, %v881
        %v946 = vadd.f32 %v799, %v882
        %v947 = vadd.f32 %v800, %v883
        %v948 = vadd.f32 %v801, %v884
        %v949 = vadd.f32 %v802, %v885
        %v950 = vadd.f32 %v803, %v886
        %v951 = vadd.f32 %v804, %v887
        %v952 = vadd.f32 %v805, %v888
        %v953 = vadd.f32 %v806, %v889
        %v954 = vadd.f32 %v807, %v890
        %v955 = vadd.f32 %v808, %v891
        %v956 = vadd.f32 %v809, %v892
        %v957 = vadd.f32 %v810, %v893
        %v958 = vadd.f32 %v811, %v894
        %v959 = vadd.f32 %v812, %v895
        %v960 = vadd.f32 %v813, %v896
        %v961 = vadd.f32 %v814, %v897
        %v962 = vlaneseq
        %v963 = vshrl.u32 %v962, 7
        %v964 = vsub.s32 0, %v963
        %v965 = vrot.slane %v388, %v964
        %v966 = vlaneseq
        %v967 = vshrl.u32 %v966, 7
        %v968 = vsub.s32 4, %v967
        %v969 = vrot.slane %v388, %v968
        %v972 = vlaneseq
        %v973 = vshrl.u32 %v972, 7
        %v974 = vsub.s32 0, %v973
        %v975 = vrot.slane %v965, %v974
        %v976 = vlaneseq
        %v977 = vshrl.u32 %v976, 7
        %v978 = vsub.s32 0, %v977
        %v979 = vrot.slane %v969, %v978
        %v980 = vmul.f32 %v392, %v975
        %v981 = vmul.f32 %v393, %v979
        %v982 = vmul.f32 %v394, %v975
        %v983 = vmul.f32 %v395, %v979
        %v984 = vmul.f32 %v396, %v975
        %v985 = vmul.f32 %v397, %v979
        %v986 = vmul.f32 %v398, %v975
        %v987 = vmul.f32 %v399, %v979
        %v988 = vmul.f32 %v400, %v975
        %v989 = vmul.f32 %v401, %v979
        %v990 = vmul.f32 %v402, %v975
        %v991 = vmul.f32 %v403, %v979
        %v992 = vmul.f32 %v404, %v975
        %v993 = vmul.f32 %v405, %v979
        %v994 = vmul.f32 %v406, %v975
        %v995 = vmul.f32 %v407, %v979
        %v996 = vmul.f32 %v408, %v975
        %v997 = vmul.f32 %v409, %v979
        %v998 = vmul.f32 %v410, %v975
        %v999 = vmul.f32 %v411, %v979
        %v1000 = vmul.f32 %v412, %v975
        %v1001 = vmul.f32 %v413, %v979
        %v1002 = vmul.f32 %v414, %v975
        %v1003 = vmul.f32 %v415, %v979
        %v1004 = vmul.f32 %v416, %v975
        %v1005 = vmul.f32 %v417, %v979
        %v1006 = vmul.f32 %v418, %v975
        %v1007 = vmul.f32 %v419, %v979
        %v1008 = vmul.f32 %v420, %v975
        %v1009 = vmul.f32 %v421, %v979
        %v1010 = vmul.f32 %v422, %v975
        %v1011 = vmul.f32 %v423, %v979
        %v1012 = vmul.f32 %v424, %v975
        %v1013 = vmul.f32 %v425, %v979
        %v1014 = vmul.f32 %v426, %v975
        %v1015 = vmul.f32 %v427, %v979
        %v1016 = vmul.f32 %v428, %v975
        %v1017 = vmul.f32 %v429, %v979
        %v1018 = vmul.f32 %v430, %v975
        %v1019 = vmul.f32 %v431, %v979
        %v1020 = vmul.f32 %v432, %v975
        %v1021 = vmul.f32 %v433, %v979
        %v1022 = vmul.f32 %v434, %v975
        %v1023 = vmul.f32 %v435, %v979
        %v1024 = vmul.f32 %v436, %v975
        %v1025 = vmul.f32 %v437, %v979
        %v1026 = vmul.f32 %v438, %v975
        %v1027 = vmul.f32 %v439, %v979
        %v1028 = vmul.f32 %v440, %v975
        %v1029 = vmul.f32 %v441, %v979
        %v1030 = vmul.f32 %v442, %v975
        %v1031 = vmul.f32 %v443, %v979
        %v1032 = vmul.f32 %v444, %v975
        %v1033 = vmul.f32 %v445, %v979
        %v1034 = vmul.f32 %v446, %v975
        %v1035 = vmul.f32 %v447, %v979
        %v1036 = vmul.f32 %v448, %v975
        %v1037 = vmul.f32 %v449, %v979
        %v1038 = vmul.f32 %v450, %v975
        %v1039 = vmul.f32 %v451, %v979
        %v1040 = vmul.f32 %v452, %v975
        %v1041 = vmul.f32 %v453, %v979
        %v1042 = vmul.f32 %v454, %v975
        %v1043 = vmul.f32 %v455, %v979
        %v1044 = vlaneseq
        %v1045 = vshrl.u32 %v1044, 7
        %v1046 = vsub.s32 0, %v1045
        %v1047 = vrot.slane %v389, %v1046
        %v1048 = vlaneseq
        %v1049 = vshrl.u32 %v1048, 7
        %v1050 = vsub.s32 4, %v1049
        %v1051 = vrot.slane %v389, %v1050
        %v1054 = vlaneseq
        %v1055 = vshrl.u32 %v1054, 7
        %v1056 = vsub.s32 0, %v1055
        %v1057 = vrot.slane %v1047, %v1056
        %v1058 = vlaneseq
        %v1059 = vshrl.u32 %v1058, 7
        %v1060 = vsub.s32 0, %v1059
        %v1061 = vrot.slane %v1051, %v1060
        %v1062 = vmul.f32 %v456, %v1057
        %v1063 = vmul.f32 %v457, %v1061
        %v1064 = vmul.f32 %v458, %v1057
        %v1065 = vmul.f32 %v459, %v1061
        %v1066 = vmul.f32 %v460, %v1057
        %v1067 = vmul.f32 %v461, %v1061
        %v1068 = vmul.f32 %v462, %v1057
        %v1069 = vmul.f32 %v463, %v1061
        %v1070 = vmul.f32 %v464, %v1057
        %v1071 = vmul.f32 %v465, %v1061
        %v1072 = vmul.f32 %v466, %v1057
        %v1073 = vmul.f32 %v467, %v1061
        %v1074 = vmul.f32 %v468, %v1057
        %v1075 = vmul.f32 %v469, %v1061
        %v1076 = vmul.f32 %v470, %v1057
        %v1077 = vmul.f32 %v471, %v1061
        %v1078 = vmul.f32 %v472, %v1057
        %v1079 = vmul.f32 %v473, %v1061
        %v1080 = vmul.f32 %v474, %v1057
        %v1081 = vmul.f32 %v475, %v1061
        %v1082 = vmul.f32 %v476, %v1057
        %v1083 = vmul.f32 %v477, %v1061
        %v1084 = vmul.f32 %v478, %v1057
        %v1085 = vmul.f32 %v479, %v1061
        %v1086 = vmul.f32 %v480, %v1057
        %v1087 = vmul.f32 %v481, %v1061
        %v1088 = vmul.f32 %v482, %v1057
        %v1089 = vmul.f32 %v483, %v1061
        %v1090 = vmul.f32 %v484, %v1057
        %v1091 = vmul.f32 %v485, %v1061
        %v1092 = vmul.f32 %v486, %v1057
        %v1093 = vmul.f32 %v487, %v1061
        %v1094 = vmul.f32 %v488, %v1057
        %v1095 = vmul.f32 %v489, %v1061
        %v1096 = vmul.f32 %v490, %v1057
        %v1097 = vmul.f32 %v491, %v1061
        %v1098 = vmul.f32 %v492, %v1057
        %v1099 = vmul.f32 %v493, %v1061
        %v1100 = vmul.f32 %v494, %v1057
        %v1101 = vmul.f32 %v495, %v1061
        %v1102 = vmul.f32 %v496, %v1057
        %v1103 = vmul.f32 %v497, %v1061
        %v1104 = vmul.f32 %v498, %v1057
        %v1105 = vmul.f32 %v499, %v1061
        %v1106 = vmul.f32 %v500, %v1057
        %v1107 = vmul.f32 %v501, %v1061
        %v1108 = vmul.f32 %v502, %v1057
        %v1109 = vmul.f32 %v503, %v1061
        %v1110 = vmul.f32 %v504, %v1057
        %v1111 = vmul.f32 %v505, %v1061
        %v1112 = vmul.f32 %v506, %v1057
        %v1113 = vmul.f32 %v507, %v1061
        %v1114 = vmul.f32 %v508, %v1057
        %v1115 = vmul.f32 %v509, %v1061
        %v1116 = vmul.f32 %v510, %v1057
        %v1117 = vmul.f32 %v511, %v1061
        %v1118 = vmul.f32 %v512, %v1057
        %v1119 = vmul.f32 %v513, %v1061
        %v1120 = vmul.f32 %v514, %v1057
        %v1121 = vmul.f32 %v515, %v1061
        %v1122 = vmul.f32 %v516, %v1057
        %v1123 = vmul.f32 %v517, %v1061
        %v1124 = vmul.f32 %v518, %v1057
        %v1125 = vmul.f32 %v519, %v1061
        %v1126 = vadd.f32 %v980, %v1062
        %v1127 = vadd.f32 %v981, %v1063
        %v1128 = vadd.f32 %v982, %v1064
        %v1129 = vadd.f32 %v983, %v1065
        %v1130 = vadd.f32 %v984, %v1066
        %v1131 = vadd.f32 %v985, %v1067
        %v1132 = vadd.f32 %v986, %v1068
        %v1133 = vadd.f32 %v987, %v1069
        %v1134 = vadd.f32 %v988, %v1070
        %v1135 = vadd.f32 %v989, %v1071
        %v1136 = vadd.f32 %v990, %v1072
        %v1137 = vadd.f32 %v991, %v1073
        %v1138 = vadd.f32 %v992, %v1074
        %v1139 = vadd.f32 %v993, %v1075
        %v1140 = vadd.f32 %v994, %v1076
        %v1141 = vadd.f32 %v995, %v1077
        %v1142 = vadd.f32 %v996, %v1078
        %v1143 = vadd.f32 %v997, %v1079
        %v1144 = vadd.f32 %v998, %v1080
        %v1145 = vadd.f32 %v999, %v1081
        %v1146 = vadd.f32 %v1000, %v1082
        %v1147 = vadd.f32 %v1001, %v1083
        %v1148 = vadd.f32 %v1002, %v1084
        %v1149 = vadd.f32 %v1003, %v1085
        %v1150 = vadd.f32 %v1004, %v1086
        %v1151 = vadd.f32 %v1005, %v1087
        %v1152 = vadd.f32 %v1006, %v1088
        %v1153 = vadd.f32 %v1007, %v1089
        %v1154 = vadd.f32 %v1008, %v1090
        %v1155 = vadd.f32 %v1009, %v1091
        %v1156 = vadd.f32 %v1010, %v1092
        %v1157 = vadd.f32 %v1011, %v1093
        %v1158 = vadd.f32 %v1012, %v1094
        %v1159 = vadd.f32 %v1013, %v1095
        %v1160 = vadd.f32 %v1014, %v1096
        %v1161 = vadd.f32 %v1015, %v1097
        %v1162 = vadd.f32 %v1016, %v1098
        %v1163 = vadd.f32 %v1017, %v1099
        %v1164 = vadd.f32 %v1018, %v1100
        %v1165 = vadd.f32 %v1019, %v1101
        %v1166 = vadd.f32 %v1020, %v1102
        %v1167 = vadd.f32 %v1021, %v1103
        %v1168 = vadd.f32 %v1022, %v1104
        %v1169 = vadd.f32 %v1023, %v1105
        %v1170 = vadd.f32 %v1024, %v1106
        %v1171 = vadd.f32 %v1025, %v1107
        %v1172 = vadd.f32 %v1026, %v1108
        %v1173 = vadd.f32 %v1027, %v1109
        %v1174 = vadd.f32 %v1028, %v1110
        %v1175 = vadd.f32 %v1029, %v1111
        %v1176 = vadd.f32 %v1030, %v1112
        %v1177 = vadd.f32 %v1031, %v1113
        %v1178 = vadd.f32 %v1032, %v1114
        %v1179 = vadd.f32 %v1033, %v1115
        %v1180 = vadd.f32 %v1034, %v1116
        %v1181 = vadd.f32 %v1035, %v1117
        %v1182 = vadd.f32 %v1036, %v1118
        %v1183 = vadd.f32 %v1037, %v1119
        %v1184 = vadd.f32 %v1038, %v1120
        %v1185 = vadd.f32 %v1039, %v1121
        %v1186 = vadd.f32 %v1040, %v1122
        %v1187 = vadd.f32 %v1041, %v1123
        %v1188 = vadd.f32 %v1042, %v1124
        %v1189 = vadd.f32 %v1043, %v1125
        %v1190 = vlaneseq
        %v1191 = vshrl.u32 %v1190, 7
        %v1192 = vsub.s32 0, %v1191
        %v1193 = vrot.slane %v390, %v1192
        %v1194 = vlaneseq
        %v1195 = vshrl.u32 %v1194, 7
        %v1196 = vsub.s32 4, %v1195
        %v1197 = vrot.slane %v390, %v1196
        %v1200 = vlaneseq
        %v1201 = vshrl.u32 %v1200, 7
        %v1202 = vsub.s32 0, %v1201
        %v1203 = vrot.slane %v1193, %v1202
        %v1204 = vlaneseq
        %v1205 = vshrl.u32 %v1204, 7
        %v1206 = vsub.s32 0, %v1205
        %v1207 = vrot.slane %v1197, %v1206
        %v1208 = vmul.f32 %v521, %v1203
        %v1209 = vmul.f32 %v522, %v1207
        %v1210 = vmul.f32 %v523, %v1203
        %v1211 = vmul.f32 %v524, %v1207
        %v1212 = vmul.f32 %v525, %v1203
        %v1213 = vmul.f32 %v526, %v1207
        %v1214 = vmul.f32 %v527, %v1203
        %v1215 = vmul.f32 %v528, %v1207
        %v1216 = vmul.f32 %v529, %v1203
        %v1217 = vmul.f32 %v530, %v1207
        %v1218 = vmul.f32 %v531, %v1203
        %v1219 = vmul.f32 %v532, %v1207
        %v1220 = vmul.f32 %v533, %v1203
        %v1221 = vmul.f32 %v534, %v1207
        %v1222 = vmul.f32 %v535, %v1203
        %v1223 = vmul.f32 %v536, %v1207
        %v1224 = vmul.f32 %v537, %v1203
        %v1225 = vmul.f32 %v538, %v1207
        %v1226 = vmul.f32 %v539, %v1203
        %v1227 = vmul.f32 %v540, %v1207
        %v1228 = vmul.f32 %v541, %v1203
        %v1229 = vmul.f32 %v542, %v1207
        %v1230 = vmul.f32 %v543, %v1203
        %v1231 = vmul.f32 %v544, %v1207
        %v1232 = vmul.f32 %v545, %v1203
        %v1233 = vmul.f32 %v546, %v1207
        %v1234 = vmul.f32 %v547, %v1203
        %v1235 = vmul.f32 %v548, %v1207
        %v1236 = vmul.f32 %v549, %v1203
        %v1237 = vmul.f32 %v550, %v1207
        %v1238 = vmul.f32 %v551, %v1203
        %v1239 = vmul.f32 %v552, %v1207
        %v1240 = vmul.f32 %v553, %v1203
        %v1241 = vmul.f32 %v554, %v1207
        %v1242 = vmul.f32 %v555, %v1203
        %v1243 = vmul.f32 %v556, %v1207
        %v1244 = vmul.f32 %v557, %v1203
        %v1245 = vmul.f32 %v558, %v1207
        %v1246 = vmul.f32 %v559, %v1203
        %v1247 = vmul.f32 %v560, %v1207
        %v1248 = vmul.f32 %v561, %v1203
        %v1249 = vmul.f32 %v562, %v1207
        %v1250 = vmul.f32 %v563, %v1203
        %v1251 = vmul.f32 %v564, %v1207
        %v1252 = vmul.f32 %v565, %v1203
        %v1253 = vmul.f32 %v566, %v1207
        %v1254 = vmul.f32 %v567, %v1203
        %v1255 = vmul.f32 %v568, %v1207
        %v1256 = vmul.f32 %v569, %v1203
        %v1257 = vmul.f32 %v570, %v1207
        %v1258 = vmul.f32 %v571, %v1203
        %v1259 = vmul.f32 %v572, %v1207
        %v1260 = vmul.f32 %v573, %v1203
        %v1261 = vmul.f32 %v574, %v1207
        %v1262 = vmul.f32 %v575, %v1203
        %v1263 = vmul.f32 %v576, %v1207
        %v1264 = vmul.f32 %v577, %v1203
        %v1265 = vmul.f32 %v578, %v1207
        %v1266 = vmul.f32 %v579, %v1203
        %v1267 = vmul.f32 %v580, %v1207
        %v1268 = vmul.f32 %v581, %v1203
        %v1269 = vmul.f32 %v582, %v1207
        %v1270 = vmul.f32 %v583, %v1203
        %v1271 = vmul.f32 %v584, %v1207
        %v1272 = vadd.f32 %v1126, %v1208
        %v1273 = vadd.f32 %v1127, %v1209
        %v1274 = vadd.f32 %v1128, %v1210
        %v1275 = vadd.f32 %v1129, %v1211
        %v1276 = vadd.f32 %v1130, %v1212
        %v1277 = vadd.f32 %v1131, %v1213
        %v1278 = vadd.f32 %v1132, %v1214
        %v1279 = vadd.f32 %v1133, %v1215
        %v1280 = vadd.f32 %v1134, %v1216
        %v1281 = vadd.f32 %v1135, %v1217
        %v1282 = vadd.f32 %v1136, %v1218
        %v1283 = vadd.f32 %v1137, %v1219
        %v1284 = vadd.f32 %v1138, %v1220
        %v1285 = vadd.f32 %v1139, %v1221
        %v1286 = vadd.f32 %v1140, %v1222
        %v1287 = vadd.f32 %v1141, %v1223
        %v1288 = vadd.f32 %v1142, %v1224
        %v1289 = vadd.f32 %v1143, %v1225
        %v1290 = vadd.f32 %v1144, %v1226
        %v1291 = vadd.f32 %v1145, %v1227
        %v1292 = vadd.f32 %v1146, %v1228
        %v1293 = vadd.f32 %v1147, %v1229
        %v1294 = vadd.f32 %v1148, %v1230
        %v1295 = vadd.f32 %v1149, %v1231
        %v1296 = vadd.f32 %v1150, %v1232
        %v1297 = vadd.f32 %v1151, %v1233
        %v1298 = vadd.f32 %v1152, %v1234
        %v1299 = vadd.f32 %v1153, %v1235
        %v1300 = vadd.f32 %v1154, %v1236
        %v1301 = vadd.f32 %v1155, %v1237
        %v1302 = vadd.f32 %v1156, %v1238
        %v1303 = vadd.f32 %v1157, %v1239
        %v1304 = vadd.f32 %v1158, %v1240
        %v1305 = vadd.f32 %v1159, %v1241
        %v1306 = vadd.f32 %v1160, %v1242
        %v1307 = vadd.f32 %v1161, %v1243
        %v1308 = vadd.f32 %v1162, %v1244
        %v1309 = vadd.f32 %v1163, %v1245
        %v1310 = vadd.f32 %v1164, %v1246
        %v1311 = vadd.f32 %v1165, %v1247
        %v1312 = vadd.f32 %v1166, %v1248
        %v1313 = vadd.f32 %v1167, %v1249
        %v1314 = vadd.f32 %v1168, %v1250
        %v1315 = vadd.f32 %v1169, %v1251
        %v1316 = vadd.f32 %v1170, %v1252
        %v1317 = vadd.f32 %v1171, %v1253
        %v1318 = vadd.f32 %v1172, %v1254
        %v1319 = vadd.f32 %v1173, %v1255
        %v1320 = vadd.f32 %v1174, %v1256
        %v1321 = vadd.f32 %v1175, %v1257
        %v1322 = vadd.f32 %v1176, %v1258
        %v1323 = vadd.f32 %v1177, %v1259
        %v1324 = vadd.f32 %v1178, %v1260
        %v1325 = vadd.f32 %v1179, %v1261
        %v1326 = vadd.f32 %v1180, %v1262
        %v1327 = vadd.f32 %v1181, %v1263
        %v1328 = vadd.f32 %v1182, %v1264
        %v1329 = vadd.f32 %v1183, %v1265
        %v1330 = vadd.f32 %v1184, %v1266
        %v1331 = vadd.f32 %v1185, %v1267
        %v1332 = vadd.f32 %v1186, %v1268
        %v1333 = vadd.f32 %v1187, %v1269
        %v1334 = vadd.f32 %v1188, %v1270
        %v1335 = vadd.f32 %v1189, %v1271
        %v1336 = vlaneseq
        %v1337 = vshrl.u32 %v1336, 7
        %v1338 = vsub.s32 2, %v1337
        %v1339 = vrot.slane %v388, %v1338
        %v1340 = vlaneseq
        %v1341 = vshrl.u32 %v1340, 7
        %v1342 = vsub.s32 6, %v1341
        %v1343 = vrot.slane %v388, %v1342
        %v1346 = vlaneseq
        %v1347 = vshrl.u32 %v1346, 7
        %v1348 = vsub.s32 2, %v1347
        %v1349 = vrot.slane %v1339, %v1348
        %v1350 = vlaneseq
        %v1351 = vshrl.u32 %v1350, 7
        %v1352 = vsub.s32 2, %v1351
        %v1353 = vrot.slane %v1343, %v1352
        %v1354 = vmul.f32 %v392, %v1349
        %v1355 = vmul.f32 %v393, %v1353
        %v1356 = vmul.f32 %v394, %v1349
        %v1357 = vmul.f32 %v395, %v1353
        %v1358 = vmul.f32 %v396, %v1349
        %v1359 = vmul.f32 %v397, %v1353
        %v1360 = vmul.f32 %v398, %v1349
        %v1361 = vmul.f32 %v399, %v1353
        %v1362 = vmul.f32 %v400, %v1349
        %v1363 = vmul.f32 %v401, %v1353
        %v1364 = vmul.f32 %v402, %v1349
        %v1365 = vmul.f32 %v403, %v1353
        %v1366 = vmul.f32 %v404, %v1349
        %v1367 = vmul.f32 %v405, %v1353
        %v1368 = vmul.f32 %v406, %v1349
        %v1369 = vmul.f32 %v407, %v1353
        %v1370 = vmul.f32 %v408, %v1349
        %v1371 = vmul.f32 %v409, %v1353
        %v1372 = vmul.f32 %v410, %v1349
        %v1373 = vmul.f32 %v411, %v1353
        %v1374 = vmul.f32 %v412, %v1349
        %v1375 = vmul.f32 %v413, %v1353
        %v1376 = vmul.f32 %v414, %v1349
        %v1377 = vmul.f32 %v415, %v1353
        %v1378 = vmul.f32 %v416, %v1349
        %v1379 = vmul.f32 %v417, %v1353
        %v1380 = vmul.f32 %v418, %v1349
        %v1381 = vmul.f32 %v419, %v1353
        %v1382 = vmul.f32 %v420, %v1349
        %v1383 = vmul.f32 %v421, %v1353
        %v1384 = vmul.f32 %v422, %v1349
        %v1385 = vmul.f32 %v423, %v1353
        %v1386 = vmul.f32 %v424, %v1349
        %v1387 = vmul.f32 %v425, %v1353
        %v1388 = vmul.f32 %v426, %v1349
        %v1389 = vmul.f32 %v427, %v1353
        %v1390 = vmul.f32 %v428, %v1349
        %v1391 = vmul.f32 %v429, %v1353
        %v1392 = vmul.f32 %v430, %v1349
        %v1393 = vmul.f32 %v431, %v1353
        %v1394 = vmul.f32 %v432, %v1349
        %v1395 = vmul.f32 %v433, %v1353
        %v1396 = vmul.f32 %v434, %v1349
        %v1397 = vmul.f32 %v435, %v1353
        %v1398 = vmul.f32 %v436, %v1349
        %v1399 = vmul.f32 %v437, %v1353
        %v1400 = vmul.f32 %v438, %v1349
        %v1401 = vmul.f32 %v439, %v1353
        %v1402 = vmul.f32 %v440, %v1349
        %v1403 = vmul.f32 %v441, %v1353
        %v1404 = vmul.f32 %v442, %v1349
        %v1405 = vmul.f32 %v443, %v1353
        %v1406 = vmul.f32 %v444, %v1349
        %v1407 = vmul.f32 %v445, %v1353
        %v1408 = vmul.f32 %v446, %v1349
        %v1409 = vmul.f32 %v447, %v1353
        %v1410 = vmul.f32 %v448, %v1349
        %v1411 = vmul.f32 %v449, %v1353
        %v1412 = vmul.f32 %v450, %v1349
        %v1413 = vmul.f32 %v451, %v1353
        %v1414 = vmul.f32 %v452, %v1349
        %v1415 = vmul.f32 %v453, %v1353
        %v1416 = vmul.f32 %v454, %v1349
        %v1417 = vmul.f32 %v455, %v1353
        %v1418 = vlaneseq
        %v1419 = vshrl.u32 %v1418, 7
        %v1420 = vsub.s32 2, %v1419
        %v1421 = vrot.slane %v389, %v1420
        %v1422 = vlaneseq
        %v1423 = vshrl.u32 %v1422, 7
        %v1424 = vsub.s32 6, %v1423
        %v1425 = vrot.slane %v389, %v1424
        %v1428 = vlaneseq
        %v1429 = vshrl.u32 %v1428, 7
        %v1430 = vsub.s32 2, %v1429
        %v1431 = vrot.slane %v1421, %v1430
        %v1432 = vlaneseq
        %v1433 = vshrl.u32 %v1432, 7
        %v1434 = vsub.s32 2, %v1433
        %v1435 = vrot.slane %v1425, %v1434
        %v1436 = vmul.f32 %v456, %v1431
        %v1437 = vmul.f32 %v457, %v1435
        %v1438 = vmul.f32 %v458, %v1431
        %v1439 = vmul.f32 %v459, %v1435
        %v1440 = vmul.f32 %v460, %v1431
        %v1441 = vmul.f32 %v461, %v1435
        %v1442 = vmul.f32 %v462, %v1431
        %v1443 = vmul.f32 %v463, %v1435
        %v1444 = vmul.f32 %v464, %v1431
        %v1445 = vmul.f32 %v465, %v1435
        %v1446 = vmul.f32 %v466, %v1431
        %v1447 = vmul.f32 %v467, %v1435
        %v1448 = vmul.f32 %v468, %v1431
        %v1449 = vmul.f32 %v469, %v1435
        %v1450 = vmul.f32 %v470, %v1431
        %v1451 = vmul.f32 %v471, %v1435
        %v1452 = vmul.f32 %v472, %v1431
        %v1453 = vmul.f32 %v473, %v1435
        %v1454 = vmul.f32 %v474, %v1431
        %v1455 = vmul.f32 %v475, %v1435
        %v1456 = vmul.f32 %v476, %v1431
        %v1457 = vmul.f32 %v477, %v1435
        %v1458 = vmul.f32 %v478, %v1431
        %v1459 = vmul.f32 %v479, %v1435
        %v1460 = vmul.f32 %v480, %v1431
        %v1461 = vmul.f32 %v481, %v1435
        %v1462 = vmul.f32 %v482, %v1431
        %v1463 = vmul.f32 %v483, %v1435
        %v1464 = vmul.f32 %v484, %v1431
        %v1465 = vmul.f32 %v485, %v1435
        %v1466 = vmul.f32 %v486, %v1431
        %v1467 = vmul.f32 %v487, %v1435
        %v1468 = vmul.f32 %v488, %v1431
        %v1469 = vmul.f32 %v489, %v1435
        %v1470 = vmul.f32 %v490, %v1431
        %v1471 = vmul.f32 %v491, %v1435
        %v1472 = vmul.f32 %v492, %v1431
        %v1473 = vmul.f32 %v493, %v1435
        %v1474 = vmul.f32 %v494, %v1431
        %v1475 = vmul.f32 %v495, %v1435
        %v1476 = vmul.f32 %v496, %v1431
        %v1477 = vmul.f32 %v497, %v1435
        %v1478 = vmul.f32 %v498, %v1431
        %v1479 = vmul.f32 %v499, %v1435
        %v1480 = vmul.f32 %v500, %v1431
        %v1481 = vmul.f32 %v501, %v1435
        %v1482 = vmul.f32 %v502, %v1431
        %v1483 = vmul.f32 %v503, %v1435
        %v1484 = vmul.f32 %v504, %v1431
        %v1485 = vmul.f32 %v505, %v1435
        %v1486 = vmul.f32 %v506, %v1431
        %v1487 = vmul.f32 %v507, %v1435
        %v1488 = vmul.f32 %v508, %v1431
        %v1489 = vmul.f32 %v509, %v1435
        %v1490 = vmul.f32 %v510, %v1431
        %v1491 = vmul.f32 %v511, %v1435
        %v1492 = vmul.f32 %v512, %v1431
        %v1493 = vmul.f32 %v513, %v1435
        %v1494 = vmul.f32 %v514, %v1431
        %v1495 = vmul.f32 %v515, %v1435
        %v1496 = vmul.f32 %v516, %v1431
        %v1497 = vmul.f32 %v517, %v1435
        %v1498 = vmul.f32 %v518, %v1431
        %v1499 = vmul.f32 %v519, %v1435
        %v1500 = vadd.f32 %v1354, %v1436
        %v1501 = vadd.f32 %v1355, %v1437
        %v1502 = vadd.f32 %v1356, %v1438
        %v1503 = vadd.f32 %v1357, %v1439
        %v1504 = vadd.f32 %v1358, %v1440
        %v1505 = vadd.f32 %v1359, %v1441
        %v1506 = vadd.f32 %v1360, %v1442
        %v1507 = vadd.f32 %v1361, %v1443
        %v1508 = vadd.f32 %v1362, %v1444
        %v1509 = vadd.f32 %v1363, %v1445
        %v1510 = vadd.f32 %v1364, %v1446
        %v1511 = vadd.f32 %v1365, %v1447
        %v1512 = vadd.f32 %v1366, %v1448
        %v1513 = vadd.f32 %v1367, %v1449
        %v1514 = vadd.f32 %v1368, %v1450
        %v1515 = vadd.f32 %v1369, %v1451
        %v1516 = vadd.f32 %v1370, %v1452
        %v1517 = vadd.f32 %v1371, %v1453
        %v1518 = vadd.f32 %v1372, %v1454
        %v1519 = vadd.f32 %v1373, %v1455
        %v1520 = vadd.f32 %v1374, %v1456
        %v1521 = vadd.f32 %v1375, %v1457
        %v1522 = vadd.f32 %v1376, %v1458
        %v1523 = vadd.f32 %v1377, %v1459
        %v1524 = vadd.f32 %v1378, %v1460
        %v1525 = vadd.f32 %v1379, %v1461
        %v1526 = vadd.f32 %v1380, %v1462
        %v1527 = vadd.f32 %v1381, %v1463
        %v1528 = vadd.f32 %v1382, %v1464
        %v1529 = vadd.f32 %v1383, %v1465
        %v1530 = vadd.f32 %v1384, %v1466
        %v1531 = vadd.f32 %v1385, %v1467
        %v1532 = vadd.f32 %v1386, %v1468
        %v1533 = vadd.f32 %v1387, %v1469
        %v1534 = vadd.f32 %v1388, %v1470
        %v1535 = vadd.f32 %v1389, %v1471
        %v1536 = vadd.f32 %v1390, %v1472
        %v1537 = vadd.f32 %v1391, %v1473
        %v1538 = vadd.f32 %v1392, %v1474
        %v1539 = vadd.f32 %v1393, %v1475
        %v1540 = vadd.f32 %v1394, %v1476
        %v1541 = vadd.f32 %v1395, %v1477
        %v1542 = vadd.f32 %v1396, %v1478
        %v1543 = vadd.f32 %v1397, %v1479
        %v1544 = vadd.f32 %v1398, %v1480
        %v1545 = vadd.f32 %v1399, %v1481
        %v1546 = vadd.f32 %v1400, %v1482
        %v1547 = vadd.f32 %v1401, %v1483
        %v1548 = vadd.f32 %v1402, %v1484
        %v1549 = vadd.f32 %v1403, %v1485
        %v1550 = vadd.f32 %v1404, %v1486
        %v1551 = vadd.f32 %v1405, %v1487
        %v1552 = vadd.f32 %v1406, %v1488
        %v1553 = vadd.f32 %v1407, %v1489
        %v1554 = vadd.f32 %v1408, %v1490
        %v1555 = vadd.f32 %v1409, %v1491
        %v1556 = vadd.f32 %v1410, %v1492
        %v1557 = vadd.f32 %v1411, %v1493
        %v1558 = vadd.f32 %v1412, %v1494
        %v1559 = vadd.f32 %v1413, %v1495
        %v1560 = vadd.f32 %v1414, %v1496
        %v1561 = vadd.f32 %v1415, %v1497
        %v1562 = vadd.f32 %v1416, %v1498
        %v1563 = vadd.f32 %v1417, %v1499
        %v1564 = vlaneseq
        %v1565 = vshrl.u32 %v1564, 7
        %v1566 = vsub.s32 2, %v1565
        %v1567 = vrot.slane %v390, %v1566
        %v1568 = vlaneseq
        %v1569 = vshrl.u32 %v1568, 7
        %v1570 = vsub.s32 6, %v1569
        %v1571 = vrot.slane %v390, %v1570
        %v1574 = vlaneseq
        %v1575 = vshrl.u32 %v1574, 7
        %v1576 = vsub.s32 2, %v1575
        %v1577 = vrot.slane %v1567, %v1576
        %v1578 = vlaneseq
        %v1579 = vshrl.u32 %v1578, 7
        %v1580 = vsub.s32 2, %v1579
        %v1581 = vrot.slane %v1571, %v1580
        %v1582 = vmul.f32 %v521, %v1577
        %v1583 = vmul.f32 %v522, %v1581
        %v1584 = vmul.f32 %v523, %v1577
        %v1585 = vmul.f32 %v524, %v1581
        %v1586 = vmul.f32 %v525, %v1577
        %v1587 = vmul.f32 %v526, %v1581
        %v1588 = vmul.f32 %v527, %v1577
        %v1589 = vmul.f32 %v528, %v1581
        %v1590 = vmul.f32 %v529, %v1577
        %v1591 = vmul.f32 %v530, %v1581
        %v1592 = vmul.f32 %v531, %v1577
        %v1593 = vmul.f32 %v532, %v1581
        %v1594 = vmul.f32 %v533, %v1577
        %v1595 = vmul.f32 %v534, %v1581
        %v1596 = vmul.f32 %v535, %v1577
        %v1597 = vmul.f32 %v536, %v1581
        %v1598 = vmul.f32 %v537, %v1577
        %v1599 = vmul.f32 %v538, %v1581
        %v1600 = vmul.f32 %v539, %v1577
        %v1601 = vmul.f32 %v540, %v1581
        %v1602 = vmul.f32 %v541, %v1577
        %v1603 = vmul.f32 %v542, %v1581
        %v1604 = vmul.f32 %v543, %v1577
        %v1605 = vmul.f32 %v544, %v1581
        %v1606 = vmul.f32 %v545, %v1577
        %v1607 = vmul.f32 %v546, %v1581
        %v1608 = vmul.f32 %v547, %v1577
        %v1609 = vmul.f32 %v548, %v1581
        %v1610 = vmul.f32 %v549, %v1577
        %v1611 = vmul.f32 %v550, %v1581
        %v1612 = vmul.f32 %v551, %v1577
        %v1613 = vmul.f32 %v552, %v1581
        %v1614 = vmul.f32 %v553, %v1577
        %v1615 = vmul.f32 %v554, %v1581
        %v1616 = vmul.f32 %v555, %v1577
        %v1617 = vmul.f32 %v556, %v1581
        %v1618 = vmul.f32 %v557, %v1577
        %v1619 = vmul.f32 %v558, %v1581
        %v1620 = vmul.f32 %v559, %v1577
        %v1621 = vmul.f32 %v560, %v1581
        %v1622 = vmul.f32 %v561, %v1577
        %v1623 = vmul.f32 %v562, %v1581
        %v1624 = vmul.f32 %v563, %v1577
        %v1625 = vmul.f32 %v564, %v1581
        %v1626 = vmul.f32 %v565, %v1577
        %v1627 = vmul.f32 %v566, %v1581
        %v1628 = vmul.f32 %v567, %v1577
        %v1629 = vmul.f32 %v568, %v1581
        %v1630 = vmul.f32 %v569, %v1577
        %v1631 = vmul.f32 %v570, %v1581
        %v1632 = vmul.f32 %v571, %v1577
        %v1633 = vmul.f32 %v572, %v1581
        %v1634 = vmul.f32 %v573, %v1577
        %v1635 = vmul.f32 %v574, %v1581
        %v1636 = vmul.f32 %v575, %v1577
        %v1637 = vmul.f32 %v576, %v1581
        %v1638 = vmul.f32 %v577, %v1577
        %v1639 = vmul.f32 %v578, %v1581
        %v1640 = vmul.f32 %v579, %v1577
        %v1641 = vmul.f32 %v580, %v1581
        %v1642 = vmul.f32 %v581, %v1577
        %v1643 = vmul.f32 %v582, %v1581
        %v1644 = vmul.f32 %v583, %v1577
        %v1645 = vmul.f32 %v584, %v1581
        %v1646 = vadd.f32 %v1500, %v1582
        %v1647 = vadd.f32 %v1501, %v1583
        %v1648 = vadd.f32 %v1502, %v1584
        %v1649 = vadd.f32 %v1503, %v1585
        %v1650 = vadd.f32 %v1504, %v1586
        %v1651 = vadd.f32 %v1505, %v1587
        %v1652 = vadd.f32 %v1506, %v1588
        %v1653 = vadd.f32 %v1507, %v1589
        %v1654 = vadd.f32 %v1508, %v1590
        %v1655 = vadd.f32 %v1509, %v1591
        %v1656 = vadd.f32 %v1510, %v1592
        %v1657 = vadd.f32 %v1511, %v1593
        %v1658 = vadd.f32 %v1512, %v1594
        %v1659 = vadd.f32 %v1513, %v1595
        %v1660 = vadd.f32 %v1514, %v1596
        %v1661 = vadd.f32 %v1515, %v1597
        %v1662 = vadd.f32 %v1516, %v1598
        %v1663 = vadd.f32 %v1517, %v1599
        %v1664 = vadd.f32 %v1518, %v1600
        %v1665 = vadd.f32 %v1519, %v1601
        %v1666 = vadd.f32 %v1520, %v1602
        %v1667 = vadd.f32 %v1521, %v1603
        %v1668 = vadd.f32 %v1522, %v1604
        %v1669 = vadd.f32 %v1523, %v1605
        %v1670 = vadd.f32 %v1524, %v1606
        %v1671 = vadd.f32 %v1525, %v1607
        %v1672 = vadd.f32 %v1526, %v1608
        %v1673 = vadd.f32 %v1527, %v1609
        %v1674 = vadd.f32 %v1528, %v1610
        %v1675 = vadd.f32 %v1529, %v1611
        %v1676 = vadd.f32 %v1530, %v1612
        %v1677 = vadd.f32 %v1531, %v1613
        %v1678 = vadd.f32 %v1532, %v1614
        %v1679 = vadd.f32 %v1533, %v1615
        %v1680 = vadd.f32 %v1534, %v1616
        %v1681 = vadd.f32 %v1535, %v1617
        %v1682 = vadd.f32 %v1536, %v1618
        %v1683 = vadd.f32 %v1537, %v1619
        %v1684 = vadd.f32 %v1538, %v1620
        %v1685 = vadd.f32 %v1539, %v1621
        %v1686 = vadd.f32 %v1540, %v1622
        %v1687 = vadd.f32 %v1541, %v1623
        %v1688 = vadd.f32 %v1542, %v1624
        %v1689 = vadd.f32 %v1543, %v1625
        %v1690 = vadd.f32 %v1544, %v1626
        %v1691 = vadd.f32 %v1545, %v1627
        %v1692 = vadd.f32 %v1546, %v1628
        %v1693 = vadd.f32 %v1547, %v1629
        %v1694 = vadd.f32 %v1548, %v1630
        %v1695 = vadd.f32 %v1549, %v1631
        %v1696 = vadd.f32 %v1550, %v1632
        %v1697 = vadd.f32 %v1551, %v1633
        %v1698 = vadd.f32 %v1552, %v1634
        %v1699 = vadd.f32 %v1553, %v1635
        %v1700 = vadd.f32 %v1554, %v1636
        %v1701 = vadd.f32 %v1555, %v1637
        %v1702 = vadd.f32 %v1556, %v1638
        %v1703 = vadd.f32 %v1557, %v1639
        %v1704 = vadd.f32 %v1558, %v1640
        %v1705 = vadd.f32 %v1559, %v1641
        %v1706 = vadd.f32 %v1560, %v1642
        %v1707 = vadd.f32 %v1561, %v1643
        %v1708 = vadd.f32 %v1562, %v1644
        %v1709 = vadd.f32 %v1563, %v1645
        %v1710 = vlaneseq
        %v1711 = vshrl.u32 %v1710, 7
        %v1712 = vadd.s32 %v1711, 8
        %vm1713 = vcmp.gt.s32.totalorder %v1711, 0
        %vm1714 = vcmp.gt.s32.totalorder %v1712, 0
        %v1715 = vrot.slane %v1272, 7
        %v1716 = vrot.slane %v1273, 7
        %v1717 = vrot.slane %v1276, 7
        %v1718 = vrot.slane %v1277, 7
        %v1719 = vrot.slane %v1280, 7
        %v1720 = vrot.slane %v1281, 7
        %v1721 = vrot.slane %v1284, 7
        %v1722 = vrot.slane %v1285, 7
        %v1723 = vrot.slane %v1288, 7
        %v1724 = vrot.slane %v1289, 7
        %v1725 = vrot.slane %v1292, 7
        %v1726 = vrot.slane %v1293, 7
        %v1727 = vrot.slane %v1296, 7
        %v1728 = vrot.slane %v1297, 7
        %v1729 = vrot.slane %v1300, 7
        %v1730 = vrot.slane %v1301, 7
        %v1731 = vrot.slane %v1304, 7
        %v1732 = vrot.slane %v1305, 7
        %v1733 = vrot.slane %v1308, 7
        %v1734 = vrot.slane %v1309, 7
        %v1735 = vrot.slane %v1312, 7
        %v1736 = vrot.slane %v1313, 7
        %v1737 = vrot.slane %v1316, 7
        %v1738 = vrot.slane %v1317, 7
        %v1739 = vrot.slane %v1320, 7
        %v1740 = vrot.slane %v1321, 7
        %v1741 = vrot.slane %v1324, 7
        %v1742 = vrot.slane %v1325, 7
        %v1743 = vrot.slane %v1328, 7
        %v1744 = vrot.slane %v1329, 7
        %v1745 = vrot.slane %v1332, 7
        %v1746 = vrot.slane %v1333, 7
        %v1747 = vrot.slane %v1274, 7
        %v1748 = vrot.slane %v1275, 7
        %v1749 = vrot.slane %v1278, 7
        %v1750 = vrot.slane %v1279, 7
        %v1751 = vrot.slane %v1282, 7
        %v1752 = vrot.slane %v1283, 7
        %v1753 = vrot.slane %v1286, 7
        %v1754 = vrot.slane %v1287, 7
        %v1755 = vrot.slane %v1290, 7
        %v1756 = vrot.slane %v1291, 7
        %v1757 = vrot.slane %v1294, 7
        %v1758 = vrot.slane %v1295, 7
        %v1759 = vrot.slane %v1298, 7
        %v1760 = vrot.slane %v1299, 7
        %v1761 = vrot.slane %v1302, 7
        %v1762 = vrot.slane %v1303, 7
        %v1763 = vrot.slane %v1306, 7
        %v1764 = vrot.slane %v1307, 7
        %v1765 = vrot.slane %v1310, 7
        %v1766 = vrot.slane %v1311, 7
        %v1767 = vrot.slane %v1314, 7
        %v1768 = vrot.slane %v1315, 7
        %v1769 = vrot.slane %v1318, 7
        %v1770 = vrot.slane %v1319, 7
        %v1771 = vrot.slane %v1322, 7
        %v1772 = vrot.slane %v1323, 7
        %v1773 = vrot.slane %v1326, 7
        %v1774 = vrot.slane %v1327, 7
        %v1775 = vrot.slane %v1330, 7
        %v1776 = vrot.slane %v1331, 7
        %v1777 = vrot.slane %v1334, 7
        %v1778 = vrot.slane %v1335, 7
        %vm1779 = vcmp.lt.s32.totalorder %v1711, 1
        %v1780 = vsel %vm1779, %v1715, %v1747
        %v1781 = vsel %vm1779, %v1716, %v1748
        %v1782 = vsel %vm1779, %v1717, %v1749
        %v1783 = vsel %vm1779, %v1718, %v1750
        %v1784 = vsel %vm1779, %v1719, %v1751
        %v1785 = vsel %vm1779, %v1720, %v1752
        %v1786 = vsel %vm1779, %v1721, %v1753
        %v1787 = vsel %vm1779, %v1722, %v1754
        %v1788 = vsel %vm1779, %v1723, %v1755
        %v1789 = vsel %vm1779, %v1724, %v1756
        %v1790 = vsel %vm1779, %v1725, %v1757
        %v1791 = vsel %vm1779, %v1726, %v1758
        %v1792 = vsel %vm1779, %v1727, %v1759
        %v1793 = vsel %vm1779, %v1728, %v1760
        %v1794 = vsel %vm1779, %v1729, %v1761
        %v1795 = vsel %vm1779, %v1730, %v1762
        %v1796 = vsel %vm1779, %v1731, %v1763
        %v1797 = vsel %vm1779, %v1732, %v1764
        %v1798 = vsel %vm1779, %v1733, %v1765
        %v1799 = vsel %vm1779, %v1734, %v1766
        %v1800 = vsel %vm1779, %v1735, %v1767
        %v1801 = vsel %vm1779, %v1736, %v1768
        %v1802 = vsel %vm1779, %v1737, %v1769
        %v1803 = vsel %vm1779, %v1738, %v1770
        %v1804 = vsel %vm1779, %v1739, %v1771
        %v1805 = vsel %vm1779, %v1740, %v1772
        %v1806 = vsel %vm1779, %v1741, %v1773
        %v1807 = vsel %vm1779, %v1742, %v1774
        %v1808 = vsel %vm1779, %v1743, %v1775
        %v1809 = vsel %vm1779, %v1744, %v1776
        %v1810 = vsel %vm1779, %v1745, %v1777
        %v1811 = vsel %vm1779, %v1746, %v1778
        %v1812 = vsel %vm1779, %v1747, %v1715
        %v1813 = vsel %vm1779, %v1748, %v1716
        %v1814 = vsel %vm1779, %v1749, %v1717
        %v1815 = vsel %vm1779, %v1750, %v1718
        %v1816 = vsel %vm1779, %v1751, %v1719
        %v1817 = vsel %vm1779, %v1752, %v1720
        %v1818 = vsel %vm1779, %v1753, %v1721
        %v1819 = vsel %vm1779, %v1754, %v1722
        %v1820 = vsel %vm1779, %v1755, %v1723
        %v1821 = vsel %vm1779, %v1756, %v1724
        %v1822 = vsel %vm1779, %v1757, %v1725
        %v1823 = vsel %vm1779, %v1758, %v1726
        %v1824 = vsel %vm1779, %v1759, %v1727
        %v1825 = vsel %vm1779, %v1760, %v1728
        %v1826 = vsel %vm1779, %v1761, %v1729
        %v1827 = vsel %vm1779, %v1762, %v1730
        %v1828 = vsel %vm1779, %v1763, %v1731
        %v1829 = vsel %vm1779, %v1764, %v1732
        %v1830 = vsel %vm1779, %v1765, %v1733
        %v1831 = vsel %vm1779, %v1766, %v1734
        %v1832 = vsel %vm1779, %v1767, %v1735
        %v1833 = vsel %vm1779, %v1768, %v1736
        %v1834 = vsel %vm1779, %v1769, %v1737
        %v1835 = vsel %vm1779, %v1770, %v1738
        %v1836 = vsel %vm1779, %v1771, %v1739
        %v1837 = vsel %vm1779, %v1772, %v1740
        %v1838 = vsel %vm1779, %v1773, %v1741
        %v1839 = vsel %vm1779, %v1774, %v1742
        %v1840 = vsel %vm1779, %v1775, %v1743
        %v1841 = vsel %vm1779, %v1776, %v1744
        %v1842 = vsel %vm1779, %v1777, %v1745
        %v1843 = vsel %vm1779, %v1778, %v1746
        %v1844 = vsel %vm1713, 1, 0
        %v1845 = vsel %vm1714, 1, 0
        %vm1846 = vcmp.eq.s32.totalorder %v1844, 1
        %vm1847 = vcmp.eq.s32.totalorder %v1845, 1
        %v1848 = vsel %vm1846, %v1812, 0.0
        %v1849 = vsel %vm1846, %v1813, 0.0
        %v1850 = vsel %vm1847, %v1780, 0.0
        %v1851 = vsel %vm1847, %v1781, 0.0
        %v1852 = vsel %vm1846, %v1814, 0.0
        %v1853 = vsel %vm1846, %v1815, 0.0
        %v1854 = vsel %vm1847, %v1782, 0.0
        %v1855 = vsel %vm1847, %v1783, 0.0
        %v1856 = vsel %vm1846, %v1816, 0.0
        %v1857 = vsel %vm1846, %v1817, 0.0
        %v1858 = vsel %vm1847, %v1784, 0.0
        %v1859 = vsel %vm1847, %v1785, 0.0
        %v1860 = vsel %vm1846, %v1818, 0.0
        %v1861 = vsel %vm1846, %v1819, 0.0
        %v1862 = vsel %vm1847, %v1786, 0.0
        %v1863 = vsel %vm1847, %v1787, 0.0
        %v1864 = vsel %vm1846, %v1820, 0.0
        %v1865 = vsel %vm1846, %v1821, 0.0
        %v1866 = vsel %vm1847, %v1788, 0.0
        %v1867 = vsel %vm1847, %v1789, 0.0
        %v1868 = vsel %vm1846, %v1822, 0.0
        %v1869 = vsel %vm1846, %v1823, 0.0
        %v1870 = vsel %vm1847, %v1790, 0.0
        %v1871 = vsel %vm1847, %v1791, 0.0
        %v1872 = vsel %vm1846, %v1824, 0.0
        %v1873 = vsel %vm1846, %v1825, 0.0
        %v1874 = vsel %vm1847, %v1792, 0.0
        %v1875 = vsel %vm1847, %v1793, 0.0
        %v1876 = vsel %vm1846, %v1826, 0.0
        %v1877 = vsel %vm1846, %v1827, 0.0
        %v1878 = vsel %vm1847, %v1794, 0.0
        %v1879 = vsel %vm1847, %v1795, 0.0
        %v1880 = vsel %vm1846, %v1828, 0.0
        %v1881 = vsel %vm1846, %v1829, 0.0
        %v1882 = vsel %vm1847, %v1796, 0.0
        %v1883 = vsel %vm1847, %v1797, 0.0
        %v1884 = vsel %vm1846, %v1830, 0.0
        %v1885 = vsel %vm1846, %v1831, 0.0
        %v1886 = vsel %vm1847, %v1798, 0.0
        %v1887 = vsel %vm1847, %v1799, 0.0
        %v1888 = vsel %vm1846, %v1832, 0.0
        %v1889 = vsel %vm1846, %v1833, 0.0
        %v1890 = vsel %vm1847, %v1800, 0.0
        %v1891 = vsel %vm1847, %v1801, 0.0
        %v1892 = vsel %vm1846, %v1834, 0.0
        %v1893 = vsel %vm1846, %v1835, 0.0
        %v1894 = vsel %vm1847, %v1802, 0.0
        %v1895 = vsel %vm1847, %v1803, 0.0
        %v1896 = vsel %vm1846, %v1836, 0.0
        %v1897 = vsel %vm1846, %v1837, 0.0
        %v1898 = vsel %vm1847, %v1804, 0.0
        %v1899 = vsel %vm1847, %v1805, 0.0
        %v1900 = vsel %vm1846, %v1838, 0.0
        %v1901 = vsel %vm1846, %v1839, 0.0
        %v1902 = vsel %vm1847, %v1806, 0.0
        %v1903 = vsel %vm1847, %v1807, 0.0
        %v1904 = vsel %vm1846, %v1840, 0.0
        %v1905 = vsel %vm1846, %v1841, 0.0
        %v1906 = vsel %vm1847, %v1808, 0.0
        %v1907 = vsel %vm1847, %v1809, 0.0
        %v1908 = vsel %vm1846, %v1842, 0.0
        %v1909 = vsel %vm1846, %v1843, 0.0
        %v1910 = vsel %vm1847, %v1810, 0.0
        %v1911 = vsel %vm1847, %v1811, 0.0
        %vm1912 = vcmp.lt.s32.totalorder %v1711, 15
        %vm1913 = vcmp.lt.s32.totalorder %v1712, 15
        %v1914 = vrot.slane %v1646, 1
        %v1915 = vrot.slane %v1647, 1
        %v1916 = vrot.slane %v1650, 1
        %v1917 = vrot.slane %v1651, 1
        %v1918 = vrot.slane %v1654, 1
        %v1919 = vrot.slane %v1655, 1
        %v1920 = vrot.slane %v1658, 1
        %v1921 = vrot.slane %v1659, 1
        %v1922 = vrot.slane %v1662, 1
        %v1923 = vrot.slane %v1663, 1
        %v1924 = vrot.slane %v1666, 1
        %v1925 = vrot.slane %v1667, 1
        %v1926 = vrot.slane %v1670, 1
        %v1927 = vrot.slane %v1671, 1
        %v1928 = vrot.slane %v1674, 1
        %v1929 = vrot.slane %v1675, 1
        %v1930 = vrot.slane %v1678, 1
        %v1931 = vrot.slane %v1679, 1
        %v1932 = vrot.slane %v1682, 1
        %v1933 = vrot.slane %v1683, 1
        %v1934 = vrot.slane %v1686, 1
        %v1935 = vrot.slane %v1687, 1
        %v1936 = vrot.slane %v1690, 1
        %v1937 = vrot.slane %v1691, 1
        %v1938 = vrot.slane %v1694, 1
        %v1939 = vrot.slane %v1695, 1
        %v1940 = vrot.slane %v1698, 1
        %v1941 = vrot.slane %v1699, 1
        %v1942 = vrot.slane %v1702, 1
        %v1943 = vrot.slane %v1703, 1
        %v1944 = vrot.slane %v1706, 1
        %v1945 = vrot.slane %v1707, 1
        %v1946 = vrot.slane %v1648, 1
        %v1947 = vrot.slane %v1649, 1
        %v1948 = vrot.slane %v1652, 1
        %v1949 = vrot.slane %v1653, 1
        %v1950 = vrot.slane %v1656, 1
        %v1951 = vrot.slane %v1657, 1
        %v1952 = vrot.slane %v1660, 1
        %v1953 = vrot.slane %v1661, 1
        %v1954 = vrot.slane %v1664, 1
        %v1955 = vrot.slane %v1665, 1
        %v1956 = vrot.slane %v1668, 1
        %v1957 = vrot.slane %v1669, 1
        %v1958 = vrot.slane %v1672, 1
        %v1959 = vrot.slane %v1673, 1
        %v1960 = vrot.slane %v1676, 1
        %v1961 = vrot.slane %v1677, 1
        %v1962 = vrot.slane %v1680, 1
        %v1963 = vrot.slane %v1681, 1
        %v1964 = vrot.slane %v1684, 1
        %v1965 = vrot.slane %v1685, 1
        %v1966 = vrot.slane %v1688, 1
        %v1967 = vrot.slane %v1689, 1
        %v1968 = vrot.slane %v1692, 1
        %v1969 = vrot.slane %v1693, 1
        %v1970 = vrot.slane %v1696, 1
        %v1971 = vrot.slane %v1697, 1
        %v1972 = vrot.slane %v1700, 1
        %v1973 = vrot.slane %v1701, 1
        %v1974 = vrot.slane %v1704, 1
        %v1975 = vrot.slane %v1705, 1
        %v1976 = vrot.slane %v1708, 1
        %v1977 = vrot.slane %v1709, 1
        %vm1978 = vcmp.lt.s32.totalorder %v1711, 7
        %v1979 = vsel %vm1978, %v1914, %v1946
        %v1980 = vsel %vm1978, %v1915, %v1947
        %v1981 = vsel %vm1978, %v1916, %v1948
        %v1982 = vsel %vm1978, %v1917, %v1949
        %v1983 = vsel %vm1978, %v1918, %v1950
        %v1984 = vsel %vm1978, %v1919, %v1951
        %v1985 = vsel %vm1978, %v1920, %v1952
        %v1986 = vsel %vm1978, %v1921, %v1953
        %v1987 = vsel %vm1978, %v1922, %v1954
        %v1988 = vsel %vm1978, %v1923, %v1955
        %v1989 = vsel %vm1978, %v1924, %v1956
        %v1990 = vsel %vm1978, %v1925, %v1957
        %v1991 = vsel %vm1978, %v1926, %v1958
        %v1992 = vsel %vm1978, %v1927, %v1959
        %v1993 = vsel %vm1978, %v1928, %v1960
        %v1994 = vsel %vm1978, %v1929, %v1961
        %v1995 = vsel %vm1978, %v1930, %v1962
        %v1996 = vsel %vm1978, %v1931, %v1963
        %v1997 = vsel %vm1978, %v1932, %v1964
        %v1998 = vsel %vm1978, %v1933, %v1965
        %v1999 = vsel %vm1978, %v1934, %v1966
        %v2000 = vsel %vm1978, %v1935, %v1967
        %v2001 = vsel %vm1978, %v1936, %v1968
        %v2002 = vsel %vm1978, %v1937, %v1969
        %v2003 = vsel %vm1978, %v1938, %v1970
        %v2004 = vsel %vm1978, %v1939, %v1971
        %v2005 = vsel %vm1978, %v1940, %v1972
        %v2006 = vsel %vm1978, %v1941, %v1973
        %v2007 = vsel %vm1978, %v1942, %v1974
        %v2008 = vsel %vm1978, %v1943, %v1975
        %v2009 = vsel %vm1978, %v1944, %v1976
        %v2010 = vsel %vm1978, %v1945, %v1977
        %v2011 = vsel %vm1978, %v1946, %v1914
        %v2012 = vsel %vm1978, %v1947, %v1915
        %v2013 = vsel %vm1978, %v1948, %v1916
        %v2014 = vsel %vm1978, %v1949, %v1917
        %v2015 = vsel %vm1978, %v1950, %v1918
        %v2016 = vsel %vm1978, %v1951, %v1919
        %v2017 = vsel %vm1978, %v1952, %v1920
        %v2018 = vsel %vm1978, %v1953, %v1921
        %v2019 = vsel %vm1978, %v1954, %v1922
        %v2020 = vsel %vm1978, %v1955, %v1923
        %v2021 = vsel %vm1978, %v1956, %v1924
        %v2022 = vsel %vm1978, %v1957, %v1925
        %v2023 = vsel %vm1978, %v1958, %v1926
        %v2024 = vsel %vm1978, %v1959, %v1927
        %v2025 = vsel %vm1978, %v1960, %v1928
        %v2026 = vsel %vm1978, %v1961, %v1929
        %v2027 = vsel %vm1978, %v1962, %v1930
        %v2028 = vsel %vm1978, %v1963, %v1931
        %v2029 = vsel %vm1978, %v1964, %v1932
        %v2030 = vsel %vm1978, %v1965, %v1933
        %v2031 = vsel %vm1978, %v1966, %v1934
        %v2032 = vsel %vm1978, %v1967, %v1935
        %v2033 = vsel %vm1978, %v1968, %v1936
        %v2034 = vsel %vm1978, %v1969, %v1937
        %v2035 = vsel %vm1978, %v1970, %v1938
        %v2036 = vsel %vm1978, %v1971, %v1939
        %v2037 = vsel %vm1978, %v1972, %v1940
        %v2038 = vsel %vm1978, %v1973, %v1941
        %v2039 = vsel %vm1978, %v1974, %v1942
        %v2040 = vsel %vm1978, %v1975, %v1943
        %v2041 = vsel %vm1978, %v1976, %v1944
        %v2042 = vsel %vm1978, %v1977, %v1945
        %v2043 = vsel %vm1912, 1, 0
        %v2044 = vsel %vm1913, 1, 0
        %vm2045 = vcmp.eq.s32.totalorder %v2043, 1
        %vm2046 = vcmp.eq.s32.totalorder %v2044, 1
        %v2047 = vsel %vm2045, %v1979, 0.0
        %v2048 = vsel %vm2045, %v1980, 0.0
        %v2049 = vsel %vm2046, %v2011, 0.0
        %v2050 = vsel %vm2046, %v2012, 0.0
        %v2051 = vsel %vm2045, %v1981, 0.0
        %v2052 = vsel %vm2045, %v1982, 0.0
        %v2053 = vsel %vm2046, %v2013, 0.0
        %v2054 = vsel %vm2046, %v2014, 0.0
        %v2055 = vsel %vm2045, %v1983, 0.0
        %v2056 = vsel %vm2045, %v1984, 0.0
        %v2057 = vsel %vm2046, %v2015, 0.0
        %v2058 = vsel %vm2046, %v2016, 0.0
        %v2059 = vsel %vm2045, %v1985, 0.0
        %v2060 = vsel %vm2045, %v1986, 0.0
        %v2061 = vsel %vm2046, %v2017, 0.0
        %v2062 = vsel %vm2046, %v2018, 0.0
        %v2063 = vsel %vm2045, %v1987, 0.0
        %v2064 = vsel %vm2045, %v1988, 0.0
        %v2065 = vsel %vm2046, %v2019, 0.0
        %v2066 = vsel %vm2046, %v2020, 0.0
        %v2067 = vsel %vm2045, %v1989, 0.0
        %v2068 = vsel %vm2045, %v1990, 0.0
        %v2069 = vsel %vm2046, %v2021, 0.0
        %v2070 = vsel %vm2046, %v2022, 0.0
        %v2071 = vsel %vm2045, %v1991, 0.0
        %v2072 = vsel %vm2045, %v1992, 0.0
        %v2073 = vsel %vm2046, %v2023, 0.0
        %v2074 = vsel %vm2046, %v2024, 0.0
        %v2075 = vsel %vm2045, %v1993, 0.0
        %v2076 = vsel %vm2045, %v1994, 0.0
        %v2077 = vsel %vm2046, %v2025, 0.0
        %v2078 = vsel %vm2046, %v2026, 0.0
        %v2079 = vsel %vm2045, %v1995, 0.0
        %v2080 = vsel %vm2045, %v1996, 0.0
        %v2081 = vsel %vm2046, %v2027, 0.0
        %v2082 = vsel %vm2046, %v2028, 0.0
        %v2083 = vsel %vm2045, %v1997, 0.0
        %v2084 = vsel %vm2045, %v1998, 0.0
        %v2085 = vsel %vm2046, %v2029, 0.0
        %v2086 = vsel %vm2046, %v2030, 0.0
        %v2087 = vsel %vm2045, %v1999, 0.0
        %v2088 = vsel %vm2045, %v2000, 0.0
        %v2089 = vsel %vm2046, %v2031, 0.0
        %v2090 = vsel %vm2046, %v2032, 0.0
        %v2091 = vsel %vm2045, %v2001, 0.0
        %v2092 = vsel %vm2045, %v2002, 0.0
        %v2093 = vsel %vm2046, %v2033, 0.0
        %v2094 = vsel %vm2046, %v2034, 0.0
        %v2095 = vsel %vm2045, %v2003, 0.0
        %v2096 = vsel %vm2045, %v2004, 0.0
        %v2097 = vsel %vm2046, %v2035, 0.0
        %v2098 = vsel %vm2046, %v2036, 0.0
        %v2099 = vsel %vm2045, %v2005, 0.0
        %v2100 = vsel %vm2045, %v2006, 0.0
        %v2101 = vsel %vm2046, %v2037, 0.0
        %v2102 = vsel %vm2046, %v2038, 0.0
        %v2103 = vsel %vm2045, %v2007, 0.0
        %v2104 = vsel %vm2045, %v2008, 0.0
        %v2105 = vsel %vm2046, %v2039, 0.0
        %v2106 = vsel %vm2046, %v2040, 0.0
        %v2107 = vsel %vm2045, %v2009, 0.0
        %v2108 = vsel %vm2045, %v2010, 0.0
        %v2109 = vsel %vm2046, %v2041, 0.0
        %v2110 = vsel %vm2046, %v2042, 0.0
        %v2111 = vadd.f32 %v898, %v1848
        %v2112 = vadd.f32 %v899, %v1849
        %v2113 = vadd.f32 %v900, %v1850
        %v2114 = vadd.f32 %v901, %v1851
        %v2115 = vadd.f32 %v902, %v1852
        %v2116 = vadd.f32 %v903, %v1853
        %v2117 = vadd.f32 %v904, %v1854
        %v2118 = vadd.f32 %v905, %v1855
        %v2119 = vadd.f32 %v906, %v1856
        %v2120 = vadd.f32 %v907, %v1857
        %v2121 = vadd.f32 %v908, %v1858
        %v2122 = vadd.f32 %v909, %v1859
        %v2123 = vadd.f32 %v910, %v1860
        %v2124 = vadd.f32 %v911, %v1861
        %v2125 = vadd.f32 %v912, %v1862
        %v2126 = vadd.f32 %v913, %v1863
        %v2127 = vadd.f32 %v914, %v1864
        %v2128 = vadd.f32 %v915, %v1865
        %v2129 = vadd.f32 %v916, %v1866
        %v2130 = vadd.f32 %v917, %v1867
        %v2131 = vadd.f32 %v918, %v1868
        %v2132 = vadd.f32 %v919, %v1869
        %v2133 = vadd.f32 %v920, %v1870
        %v2134 = vadd.f32 %v921, %v1871
        %v2135 = vadd.f32 %v922, %v1872
        %v2136 = vadd.f32 %v923, %v1873
        %v2137 = vadd.f32 %v924, %v1874
        %v2138 = vadd.f32 %v925, %v1875
        %v2139 = vadd.f32 %v926, %v1876
        %v2140 = vadd.f32 %v927, %v1877
        %v2141 = vadd.f32 %v928, %v1878
        %v2142 = vadd.f32 %v929, %v1879
        %v2143 = vadd.f32 %v930, %v1880
        %v2144 = vadd.f32 %v931, %v1881
        %v2145 = vadd.f32 %v932, %v1882
        %v2146 = vadd.f32 %v933, %v1883
        %v2147 = vadd.f32 %v934, %v1884
        %v2148 = vadd.f32 %v935, %v1885
        %v2149 = vadd.f32 %v936, %v1886
        %v2150 = vadd.f32 %v937, %v1887
        %v2151 = vadd.f32 %v938, %v1888
        %v2152 = vadd.f32 %v939, %v1889
        %v2153 = vadd.f32 %v940, %v1890
        %v2154 = vadd.f32 %v941, %v1891
        %v2155 = vadd.f32 %v942, %v1892
        %v2156 = vadd.f32 %v943, %v1893
        %v2157 = vadd.f32 %v944, %v1894
        %v2158 = vadd.f32 %v945, %v1895
        %v2159 = vadd.f32 %v946, %v1896
        %v2160 = vadd.f32 %v947, %v1897
        %v2161 = vadd.f32 %v948, %v1898
        %v2162 = vadd.f32 %v949, %v1899
        %v2163 = vadd.f32 %v950, %v1900
        %v2164 = vadd.f32 %v951, %v1901
        %v2165 = vadd.f32 %v952, %v1902
        %v2166 = vadd.f32 %v953, %v1903
        %v2167 = vadd.f32 %v954, %v1904
        %v2168 = vadd.f32 %v955, %v1905
        %v2169 = vadd.f32 %v956, %v1906
        %v2170 = vadd.f32 %v957, %v1907
        %v2171 = vadd.f32 %v958, %v1908
        %v2172 = vadd.f32 %v959, %v1909
        %v2173 = vadd.f32 %v960, %v1910
        %v2174 = vadd.f32 %v961, %v1911
        %v2175 = vadd.f32 %v2111, %v2047
        %v2176 = vadd.f32 %v2112, %v2048
        %v2177 = vadd.f32 %v2113, %v2049
        %v2178 = vadd.f32 %v2114, %v2050
        %v2179 = vadd.f32 %v2115, %v2051
        %v2180 = vadd.f32 %v2116, %v2052
        %v2181 = vadd.f32 %v2117, %v2053
        %v2182 = vadd.f32 %v2118, %v2054
        %v2183 = vadd.f32 %v2119, %v2055
        %v2184 = vadd.f32 %v2120, %v2056
        %v2185 = vadd.f32 %v2121, %v2057
        %v2186 = vadd.f32 %v2122, %v2058
        %v2187 = vadd.f32 %v2123, %v2059
        %v2188 = vadd.f32 %v2124, %v2060
        %v2189 = vadd.f32 %v2125, %v2061
        %v2190 = vadd.f32 %v2126, %v2062
        %v2191 = vadd.f32 %v2127, %v2063
        %v2192 = vadd.f32 %v2128, %v2064
        %v2193 = vadd.f32 %v2129, %v2065
        %v2194 = vadd.f32 %v2130, %v2066
        %v2195 = vadd.f32 %v2131, %v2067
        %v2196 = vadd.f32 %v2132, %v2068
        %v2197 = vadd.f32 %v2133, %v2069
        %v2198 = vadd.f32 %v2134, %v2070
        %v2199 = vadd.f32 %v2135, %v2071
        %v2200 = vadd.f32 %v2136, %v2072
        %v2201 = vadd.f32 %v2137, %v2073
        %v2202 = vadd.f32 %v2138, %v2074
        %v2203 = vadd.f32 %v2139, %v2075
        %v2204 = vadd.f32 %v2140, %v2076
        %v2205 = vadd.f32 %v2141, %v2077
        %v2206 = vadd.f32 %v2142, %v2078
        %v2207 = vadd.f32 %v2143, %v2079
        %v2208 = vadd.f32 %v2144, %v2080
        %v2209 = vadd.f32 %v2145, %v2081
        %v2210 = vadd.f32 %v2146, %v2082
        %v2211 = vadd.f32 %v2147, %v2083
        %v2212 = vadd.f32 %v2148, %v2084
        %v2213 = vadd.f32 %v2149, %v2085
        %v2214 = vadd.f32 %v2150, %v2086
        %v2215 = vadd.f32 %v2151, %v2087
        %v2216 = vadd.f32 %v2152, %v2088
        %v2217 = vadd.f32 %v2153, %v2089
        %v2218 = vadd.f32 %v2154, %v2090
        %v2219 = vadd.f32 %v2155, %v2091
        %v2220 = vadd.f32 %v2156, %v2092
        %v2221 = vadd.f32 %v2157, %v2093
        %v2222 = vadd.f32 %v2158, %v2094
        %v2223 = vadd.f32 %v2159, %v2095
        %v2224 = vadd.f32 %v2160, %v2096
        %v2225 = vadd.f32 %v2161, %v2097
        %v2226 = vadd.f32 %v2162, %v2098
        %v2227 = vadd.f32 %v2163, %v2099
        %v2228 = vadd.f32 %v2164, %v2100
        %v2229 = vadd.f32 %v2165, %v2101
        %v2230 = vadd.f32 %v2166, %v2102
        %v2231 = vadd.f32 %v2167, %v2103
        %v2232 = vadd.f32 %v2168, %v2104
        %v2233 = vadd.f32 %v2169, %v2105
        %v2234 = vadd.f32 %v2170, %v2106
        %v2235 = vadd.f32 %v2171, %v2107
        %v2236 = vadd.f32 %v2172, %v2108
        %v2237 = vadd.f32 %v2173, %v2109
        %v2238 = vadd.f32 %v2174, %v2110
        %v2240 = vlaneseq
        %v2241 = vshrl.u32 %v2240, 7
        %v2242 = vsub.s32 0, %v2241
        %v2243 = vrot.slane %v391, %v2242
        %v2244 = vlaneseq
        %v2245 = vshrl.u32 %v2244, 7
        %v2246 = vsub.s32 1, %v2245
        %v2247 = vrot.slane %v391, %v2246
        %v2250 = vadd.f32 %v2175, %v2243
        %v2251 = vadd.f32 %v2176, %v2247
        %v2252 = vadd.f32 %v2177, %v2243
        %v2253 = vadd.f32 %v2178, %v2247
        %v2254 = vadd.f32 %v2179, %v2243
        %v2255 = vadd.f32 %v2180, %v2247
        %v2256 = vadd.f32 %v2181, %v2243
        %v2257 = vadd.f32 %v2182, %v2247
        %v2258 = vadd.f32 %v2183, %v2243
        %v2259 = vadd.f32 %v2184, %v2247
        %v2260 = vadd.f32 %v2185, %v2243
        %v2261 = vadd.f32 %v2186, %v2247
        %v2262 = vadd.f32 %v2187, %v2243
        %v2263 = vadd.f32 %v2188, %v2247
        %v2264 = vadd.f32 %v2189, %v2243
        %v2265 = vadd.f32 %v2190, %v2247
        %v2266 = vadd.f32 %v2191, %v2243
        %v2267 = vadd.f32 %v2192, %v2247
        %v2268 = vadd.f32 %v2193, %v2243
        %v2269 = vadd.f32 %v2194, %v2247
        %v2270 = vadd.f32 %v2195, %v2243
        %v2271 = vadd.f32 %v2196, %v2247
        %v2272 = vadd.f32 %v2197, %v2243
        %v2273 = vadd.f32 %v2198, %v2247
        %v2274 = vadd.f32 %v2199, %v2243
        %v2275 = vadd.f32 %v2200, %v2247
        %v2276 = vadd.f32 %v2201, %v2243
        %v2277 = vadd.f32 %v2202, %v2247
        %v2278 = vadd.f32 %v2203, %v2243
        %v2279 = vadd.f32 %v2204, %v2247
        %v2280 = vadd.f32 %v2205, %v2243
        %v2281 = vadd.f32 %v2206, %v2247
        %v2282 = vadd.f32 %v2207, %v2243
        %v2283 = vadd.f32 %v2208, %v2247
        %v2284 = vadd.f32 %v2209, %v2243
        %v2285 = vadd.f32 %v2210, %v2247
        %v2286 = vadd.f32 %v2211, %v2243
        %v2287 = vadd.f32 %v2212, %v2247
        %v2288 = vadd.f32 %v2213, %v2243
        %v2289 = vadd.f32 %v2214, %v2247
        %v2290 = vadd.f32 %v2215, %v2243
        %v2291 = vadd.f32 %v2216, %v2247
        %v2292 = vadd.f32 %v2217, %v2243
        %v2293 = vadd.f32 %v2218, %v2247
        %v2294 = vadd.f32 %v2219, %v2243
        %v2295 = vadd.f32 %v2220, %v2247
        %v2296 = vadd.f32 %v2221, %v2243
        %v2297 = vadd.f32 %v2222, %v2247
        %v2298 = vadd.f32 %v2223, %v2243
        %v2299 = vadd.f32 %v2224, %v2247
        %v2300 = vadd.f32 %v2225, %v2243
        %v2301 = vadd.f32 %v2226, %v2247
        %v2302 = vadd.f32 %v2227, %v2243
        %v2303 = vadd.f32 %v2228, %v2247
        %v2304 = vadd.f32 %v2229, %v2243
        %v2305 = vadd.f32 %v2230, %v2247
        %v2306 = vadd.f32 %v2231, %v2243
        %v2307 = vadd.f32 %v2232, %v2247
        %v2308 = vadd.f32 %v2233, %v2243
        %v2309 = vadd.f32 %v2234, %v2247
        %v2310 = vadd.f32 %v2235, %v2243
        %v2311 = vadd.f32 %v2236, %v2247
        %v2312 = vadd.f32 %v2237, %v2243
        %v2313 = vadd.f32 %v2238, %v2247
        %2314 = vst [vmem:[%s236] sm:$0xff] %v2250
        %2315 = vst [vmem:[%s236 + $0x8] sm:$0xff] %v2251
        %2316 = vst [vmem:[%s236 + $0x10] sm:$0xff] %v2252
        %2317 = vst [vmem:[%s236 + $0x18] sm:$0xff] %v2253
        %2318 = vst [vmem:[%s236 + $0x20] sm:$0xff] %v2254
        %2319 = vst [vmem:[%s236 + $0x28] sm:$0xff] %v2255
        %2320 = vst [vmem:[%s236 + $0x30] sm:$0xff] %v2256
        %2321 = vst [vmem:[%s236 + $0x38] sm:$0xff] %v2257
        %2322 = vst [vmem:[%s236 + $0x40] sm:$0xff] %v2258
        %2323 = vst [vmem:[%s236 + $0x48] sm:$0xff] %v2259
        %2324 = vst [vmem:[%s236 + $0x50] sm:$0xff] %v2260
        %2325 = vst [vmem:[%s236 + $0x58] sm:$0xff] %v2261
        %2326 = vst [vmem:[%s236 + $0x60] sm:$0xff] %v2262
        %2327 = vst [vmem:[%s236 + $0x68] sm:$0xff] %v2263
        %2328 = vst [vmem:[%s236 + $0x70] sm:$0xff] %v2264
        %2329 = vst [vmem:[%s236 + $0x78] sm:$0xff] %v2265
        %2330 = vst [vmem:[%s236 + $0x80] sm:$0xff] %v2266
        %2331 = vst [vmem:[%s236 + $0x88] sm:$0xff] %v2267
        %2332 = vst [vmem:[%s236 + $0x90] sm:$0xff] %v2268
        %2333 = vst [vmem:[%s236 + $0x98] sm:$0xff] %v2269
        %2334 = vst [vmem:[%s236 + $0xa0] sm:$0xff] %v2270
        %2335 = vst [vmem:[%s236 + $0xa8] sm:$0xff] %v2271
        %2336 = vst [vmem:[%s236 + $0xb0] sm:$0xff] %v2272
        %2337 = vst [vmem:[%s236 + $0xb8] sm:$0xff] %v2273
        %2338 = vst [vmem:[%s236 + $0xc0] sm:$0xff] %v2274
        %2339 = vst [vmem:[%s236 + $0xc8] sm:$0xff] %v2275
        %2340 = vst [vmem:[%s236 + $0xd0] sm:$0xff] %v2276
        %2341 = vst [vmem:[%s236 + $0xd8] sm:$0xff] %v2277
        %2342 = vst [vmem:[%s236 + $0xe0] sm:$0xff] %v2278
        %2343 = vst [vmem:[%s236 + $0xe8] sm:$0xff] %v2279
        %2344 = vst [vmem:[%s236 + $0xf0] sm:$0xff] %v2280
        %2345 = vst [vmem:[%s236 + $0xf8] sm:$0xff] %v2281
        %2346 = vst [vmem:[%s236 + $0x100] sm:$0xff] %v2282
        %2347 = vst [vmem:[%s236 + $0x108] sm:$0xff] %v2283
        %2348 = vst [vmem:[%s236 + $0x110] sm:$0xff] %v2284
        %2349 = vst [vmem:[%s236 + $0x118] sm:$0xff] %v2285
        %2350 = vst [vmem:[%s236 + $0x120] sm:$0xff] %v2286
        %2351 = vst [vmem:[%s236 + $0x128] sm:$0xff] %v2287
        %2352 = vst [vmem:[%s236 + $0x130] sm:$0xff] %v2288
        %2353 = vst [vmem:[%s236 + $0x138] sm:$0xff] %v2289
        %2354 = vst [vmem:[%s236 + $0x140] sm:$0xff] %v2290
        %2355 = vst [vmem:[%s236 + $0x148] sm:$0xff] %v2291
        %2356 = vst [vmem:[%s236 + $0x150] sm:$0xff] %v2292
        %2357 = vst [vmem:[%s236 + $0x158] sm:$0xff] %v2293
        %2358 = vst [vmem:[%s236 + $0x160] sm:$0xff] %v2294
        %2359 = vst [vmem:[%s236 + $0x168] sm:$0xff] %v2295
        %2360 = vst [vmem:[%s236 + $0x170] sm:$0xff] %v2296
        %2361 = vst [vmem:[%s236 + $0x178] sm:$0xff] %v2297
        %2362 = vst [vmem:[%s236 + $0x180] sm:$0xff] %v2298
        %2363 = vst [vmem:[%s236 + $0x188] sm:$0xff] %v2299
        %2364 = vst [vmem:[%s236 + $0x190] sm:$0xff] %v2300
        %2365 = vst [vmem:[%s236 + $0x198] sm:$0xff] %v2301
        %2366 = vst [vmem:[%s236 + $0x1a0] sm:$0xff] %v2302
        %2367 = vst [vmem:[%s236 + $0x1a8] sm:$0xff] %v2303
        %2368 = vst [vmem:[%s236 + $0x1b0] sm:$0xff] %v2304
        %2369 = vst [vmem:[%s236 + $0x1b8] sm:$0xff] %v2305
        %2370 = vst [vmem:[%s236 + $0x1c0] sm:$0xff] %v2306
        %2371 = vst [vmem:[%s236 + $0x1c8] sm:$0xff] %v2307
        %2372 = vst [vmem:[%s236 + $0x1d0] sm:$0xff] %v2308
        %2373 = vst [vmem:[%s236 + $0x1d8] sm:$0xff] %v2309
        %2374 = vst [vmem:[%s236 + $0x1e0] sm:$0xff] %v2310
        %2375 = vst [vmem:[%s236 + $0x1e8] sm:$0xff] %v2311
        %2376 = vst [vmem:[%s236 + $0x1f0] sm:$0xff] %v2312
        %2377 = vst [vmem:[%s236 + $0x1f8] sm:$0xff] %v2313
        %s2378 = sand.u32 %s122, 1
        %s2379 = scalar_lea.sflag [#allocation5], %s2378
        %s2380 = sand.u32 %s122, 1
        %s2381 = smul.addr %s2380, 512
        %s2382 = scalar_lea.vmem [#allocation6], %s2381
        // Predicated region
        $region37: #{dwconv_forward.1} parent=31 // pred_check
          %p2383 = pneg %p132
        $region38: #{dwconv_forward.1} parent=31 // pred_check_branch
          %2385 = sbr.rel (%p2383) target = $region40
        $region39: #{dwconv_forward.1} parent=31 // pred_region
          %s2386 = smul.u32 2, %s24
          %s2388 = ssub.s32 8192, 8192
          %2389 = vsyncadd %s2379, %s2388
          %s2390 = smul.addr %s25, 64
          %s2391 = sadd.s32 %s2386, %s2390
          %s2392 = smul.addr %s2391, 128
          %s2393 = scalar_lea.hbm %s3, %s2392
          %s2394 = sshll.u32 %s2382, 4
          %s2395 = int_to_ptr.vmem [resolvable:$true] %s2394
          %2400 = dma.vmem_to_hbm [thread:$0]  %s2395, 8192, %s2393, %s2379, 256, 256, 16
        $region40: #{dwconv_forward.1} parent=31 // pred_fallthru
          _
      $region32: #{dwconv_forward.1} parent=5 // pred_fallthru
        _
      %p2401 = scmp.le.s32.totalorder 2, %s15
      // Predicated region
      $region41: #{dwconv_forward.1} parent=5 // pred_check
        %p2402 = pneg %p2401
      $region42: #{dwconv_forward.1} parent=5 // pred_check_branch
        %2404 = sbr.rel (%p2402) target = $region44
      $region43: #{dwconv_forward.1} parent=5 // pred_region
        %s2405 = ssub.s32 %s15, 2
        // Predicated region
        $region45: #{dwconv_forward.1} parent=43 // pred_check
          %p2406 = pneg %p138
        $region46: #{dwconv_forward.1} parent=43 // pred_check_branch
          %2408 = sbr.rel (%p2406) target = $region48
        $region47: #{dwconv_forward.1} parent=43 // pred_region
          %s2409 = sand.u32 %s123, 1
          %s2410 = scalar_lea.sflag [#allocation5], %s2409
          %s2411 = sand.u32 %s123, 1
          %s2412 = smul.addr %s2411, 512
          %s2413 = scalar_lea.vmem [#allocation6], %s2412
          %2414 = dma.done %s2410, 8192
        $region48: #{dwconv_forward.1} parent=43 // pred_fallthru
          _
      $region44: #{dwconv_forward.1} parent=5 // pred_fallthru
        _
    $region6: #{dwconv_forward.1} parent=1 // loop_footer
      %s19 = sadd.s32 1, %s15
    $region7: #{dwconv_forward.1} parent=1 // loop_footer_branch
      %14 = sbr.rel target = $region3
    $region8: #{dwconv_forward.1} parent=1 // loop_exit
      _
    %2415 = vsyncpa [#allocation4], 1
    %s2416 = scalar_lea.sflag [#allocation4], 1
    %2417 = vsyncpa %s2416, 1
    %2418 = vsyncpa [#allocation5], 1
    %s2419 = scalar_lea.sflag [#allocation5], 1
    %2420 = vsyncpa %s2419, 1

</llo_original>
